<compile_context>
chip_gen: v5e
topology: v5e:2x2
jax: 0.10.0
libtpu: 0.0.40
codegen_flags: <defaults>
</compile_context>

<pallas_src>
import jax
import jax.numpy as jnp
from jax.experimental import pallas as pl
from jax.experimental.pallas import tpu as pltpu

LANE = 128  # lane width; 128-aligned feature dims (use 256 multiples on v6e/v7x models)

# Demo hyperparameters (small, deterministic)
BATCH = 16
INPUT_SIZE = 16        # backcast length
FORECAST_SIZE = 8      # forecast length
THETA_SIZE = INPUT_SIZE + FORECAST_SIZE
LAYERS = 3
LAYER_SIZE = 32


def _round_up(n, m=LANE):
    return ((n + m - 1) // m) * m


def _make_nbeats_kernel(num_layers):
    """N-BEATS block kernel with `num_layers` Linear+ReLU layers (unrolled)."""

    def kernel(*refs):
        # refs = [x, (w_l, b_l) * num_layers, wt, bt, theta_out]
        x_ref = refs[0]
        layer_refs = refs[1:1 + 2 * num_layers]
        wt_ref = refs[1 + 2 * num_layers]
        bt_ref = refs[2 + 2 * num_layers]
        theta_ref = refs[-1]

        # MLP hot path: bf16 matmuls on the MXU, f32 accumulation, f32
        # bias-add + ReLU on the VPU, cast back to bf16 for the next dot.
        h = x_ref[...]                                   # bf16 (tile, in_pad)
        for l in range(num_layers):
            w_ref = layer_refs[2 * l]
            b_ref = layer_refs[2 * l + 1]
            acc = jnp.dot(h, w_ref[...], preferred_element_type=jnp.float32)
            h = jnp.maximum(acc + b_ref[...], 0.0).astype(jnp.bfloat16)

        # basis_parameters projection -> single lane-dense f32 theta slab.
        theta = jnp.dot(h, wt_ref[...], preferred_element_type=jnp.float32)
        theta_ref[...] = (theta + bt_ref[...]).astype(theta_ref.dtype)

    return kernel


def init_params(key, *, num_layers=LAYERS, input_size=INPUT_SIZE,
                layer_size=LAYER_SIZE, theta_size=THETA_SIZE):
    """Raw f32 parameters at the module's original (unpadded) shapes.

    Weight layout is (in_features, out_features) — transpose of
    torch.nn.Linear.weight — so the kernel computes h @ W + b directly.
    """
    ks = jax.random.split(key, 2 * num_layers + 2)
    scale = 0.1
    params = {}
    in_f = input_size
    for l in range(num_layers):
        params[f"w{l}"] = scale * jax.random.normal(
            ks[2 * l], (in_f, layer_size), jnp.float32)
        params[f"b{l}"] = scale * jax.random.normal(
            ks[2 * l + 1], (1, layer_size), jnp.float32)
        in_f = layer_size
    params["wt"] = scale * jax.random.normal(
        ks[-2], (layer_size, theta_size), jnp.float32)
    params["bt"] = scale * jax.random.normal(
        ks[-1], (1, theta_size), jnp.float32)
    return params


def prepare_params(params, *, num_layers=LAYERS, input_size=INPUT_SIZE,
                   layer_size=LAYER_SIZE, theta_size=THETA_SIZE):
    """Zero-pad feature dims to 128 lanes; weights -> bf16, biases stay f32.

    Done once (outside the hot path); padded columns/rows are zero so the
    padded lanes are exact zeros through the whole block.
    """
    in_pad = _round_up(input_size)
    l_pad = _round_up(layer_size)
    t_pad = _round_up(theta_size)

    prepared = {}
    in_f, in_fp = input_size, in_pad
    for l in range(num_layers):
        w = jnp.pad(params[f"w{l}"],
                    ((0, in_fp - in_f), (0, l_pad - layer_size)))
        b = jnp.pad(params[f"b{l}"], ((0, 0), (0, l_pad - layer_size)))
        prepared[f"w{l}"] = w.astype(jnp.bfloat16)
        prepared[f"b{l}"] = b.astype(jnp.float32)
        in_f, in_fp = layer_size, l_pad
    prepared["wt"] = jnp.pad(
        params["wt"], ((0, l_pad - layer_size), (0, t_pad - theta_size))
    ).astype(jnp.bfloat16)
    prepared["bt"] = jnp.pad(
        params["bt"], ((0, 0), (0, t_pad - theta_size))).astype(jnp.float32)
    return prepared


def nbeats_block(x, prepared, *, num_layers=LAYERS, input_size=INPUT_SIZE,
                 theta_size=THETA_SIZE, batch_tile=None):
    """x: (batch, input_size) f32. prepared: padded bf16/f32 params.

    Returns (backcast, forecast) — GenericBasis split of theta at the
    ORIGINAL (unpadded) offsets.
    """
    batch = x.shape[0]
    in_pad = prepared["w0"].shape[0]
    l_pad = prepared["wt"].shape[0]
    t_pad = prepared["wt"].shape[1]

    # Pad x to the lane-aligned width and cast to bf16 (padded cols are zero;
    # the matching padded rows of w0 are zero, so the result is unchanged).
    x_p = jnp.pad(x, ((0, 0), (0, in_pad - x.shape[1]))).astype(jnp.bfloat16)

    # Batch tiling: default 512-wide tiles (better MXU M fill + fewer grid
    # steps), capped at batch//2 so grid >= 2 and "parallel" can shard across
    # both v7x TensorCores.  Tile must be a multiple of 8 (sublane rule).
    if batch_tile is None:
        if batch <= 8:
            batch_tile = batch
        else:
            batch_tile = min(512, batch // 2)
            batch_tile = max(8, (batch_tile // 8) * 8)
            if batch % batch_tile != 0:
                batch_tile = batch
    assert batch % batch_tile == 0, "batch must be a multiple of batch_tile"
    grid = (batch // batch_tile,)

    weight_args = []
    for l in range(num_layers):
        weight_args += [prepared[f"w{l}"], prepared[f"b{l}"]]
    weight_args += [prepared["wt"], prepared["bt"]]

    # VMEM budget: double-buffered x/theta tiles + resident weights + in-kernel
    # activation headroom.  Clamped to 64 MiB (v7x physical per-TC VMEM).
    w_bytes = sum(int(a.size) * a.dtype.itemsize for a in weight_args)
    x_tile_bytes = batch_tile * in_pad * 2        # bf16
    t_tile_bytes = batch_tile * t_pad * 4         # f32
    act_bytes = 4 * batch_tile * l_pad * 4        # f32 intermediates headroom
    vmem_limit = (2 * x_tile_bytes + 2 * t_tile_bytes + 2 * w_bytes
                  + act_bytes + (4 << 20))
    vmem_limit = int(min(max(vmem_limit, 16 << 20), 64 << 20))

    flops = 2 * batch * (in_pad * l_pad
                         + (num_layers - 1) * l_pad * l_pad
                         + l_pad * t_pad)
    bytes_accessed = batch * in_pad * 2 + batch * t_pad * 4 + w_bytes
    cost = pl.CostEstimate(flops=int(flops), transcendentals=0,
                           bytes_accessed=int(bytes_accessed))

    out_shape = jax.ShapeDtypeStruct((batch, t_pad), jnp.float32)
    kernel = _make_nbeats_kernel(num_layers)

    def run(use_vmem_space):
        if use_vmem_space:
            # Whole-array VMEM operands: copied in once, no per-grid-step
            # double-buffering (halves resident-weight VMEM vs blocked specs).
            resident = [pl.BlockSpec(memory_space=pltpu.MemorySpace.VMEM)
                        for _ in weight_args]
        else:
            # Fallback: full-array blocks with constant index_map (weights
            # stay VMEM-resident but are double-buffered by the pipeline).
            resident = [pl.BlockSpec(a.shape, lambda i, _nd=a.ndim: (0,) * _nd)
                        for a in weight_args]
        in_specs = ([pl.BlockSpec((batch_tile, in_pad), lambda i: (i, 0))]
                    + resident)
        return pl.pallas_call(
            kernel,
            out_shape=out_shape,
            grid=grid,
            in_specs=in_specs,
            out_specs=pl.BlockSpec((batch_tile, t_pad), lambda i: (i, 0)),
            compiler_params=pltpu.CompilerParams(
                dimension_semantics=("parallel",),
                vmem_limit_bytes=vmem_limit),
            cost_estimate=cost,
        )(x_p, *weight_args)

    try:
        theta = run(True)
    except Exception:  # older Pallas: memory-space-only VMEM inputs unsupported
        theta = run(False)

    # GenericBasis: backcast = theta[:, :input_size],
    #               forecast = theta[:, -forecast:]  (crop at ORIGINAL widths,
    # not the padded slab width; padded lanes are exact zeros and discarded).
    return theta[:, :input_size], theta[:, input_size:theta_size]


def nbeats_ref(x, prepared, *, num_layers=LAYERS, input_size=INPUT_SIZE,
               theta_size=THETA_SIZE):
    """Pure-JAX reference with identical bf16/f32 numerics."""
    in_pad = prepared["w0"].shape[0]
    h = jnp.pad(x, ((0, 0), (0, in_pad - x.shape[1]))).astype(jnp.bfloat16)
    for l in range(num_layers):
        acc = jnp.dot(h, prepared[f"w{l}"], preferred_element_type=jnp.float32)
        h = jnp.maximum(acc + prepared[f"b{l}"], 0.0).astype(jnp.bfloat16)
    theta = jnp.dot(h, prepared["wt"],
                    preferred_element_type=jnp.float32) + prepared["bt"]
    return theta[:, :input_size], theta[:, input_size:theta_size]


if __name__ == "__main__":
    key = jax.random.PRNGKey(0)
    kx, kp = jax.random.split(key)
    x = jax.random.normal(kx, (BATCH, INPUT_SIZE), jnp.float32)
    params = init_params(kp)
    prepared = prepare_params(params)

    backcast, forecast = nbeats_block(x, prepared)
    backcast = jax.block_until_ready(backcast)
    forecast = jax.block_until_ready(forecast)

    ref_back, ref_fore = nbeats_ref(x, prepared)
    assert backcast.shape == (BATCH, INPUT_SIZE)
    assert forecast.shape == (BATCH, FORECAST_SIZE)
    assert jnp.allclose(backcast, ref_back, atol=2e-3, rtol=2e-3)
    assert jnp.allclose(forecast, ref_fore, atol=2e-3, rtol=2e-3)

    print("KERNEL_OK")
</pallas_src>

<mosaic_0001>
module attributes {stable_mosaic.version = 11 : i64} {
  func.func @kernel(%arg0: i32, %arg1: memref<8x128xbf16, #tpu.memory_space<vmem>>, %arg2: memref<128x128xbf16, #tpu.memory_space<vmem>>, %arg3: memref<1x128xf32, #tpu.memory_space<vmem>>, %arg4: memref<128x128xbf16, #tpu.memory_space<vmem>>, %arg5: memref<1x128xf32, #tpu.memory_space<vmem>>, %arg6: memref<128x128xbf16, #tpu.memory_space<vmem>>, %arg7: memref<1x128xf32, #tpu.memory_space<vmem>>, %arg8: memref<128x128xbf16, #tpu.memory_space<vmem>>, %arg9: memref<1x128xf32, #tpu.memory_space<vmem>>, %arg10: memref<8x128xf32, #tpu.memory_space<vmem>>) attributes {dimension_semantics = [#tpu.dimension_semantics<parallel>], iteration_bounds = array<i64: 2>, scalar_prefetch = 0 : i64, scratch_operands = 0 : i64, tpu.core_type = #tpu.core_type<tc>, window_params = [{transform_indices = @transform_0, window_bounds = array<i64: 8, 128>}, {pipeline_mode = #tpu.pipeline_mode<synchronous>, transform_indices = @transform_1, window_bounds = array<i64: 128, 128>}, {pipeline_mode = #tpu.pipeline_mode<synchronous>, transform_indices = @transform_2, window_bounds = array<i64: 1, 128>}, {pipeline_mode = #tpu.pipeline_mode<synchronous>, transform_indices = @transform_3, window_bounds = array<i64: 128, 128>}, {pipeline_mode = #tpu.pipeline_mode<synchronous>, transform_indices = @transform_4, window_bounds = array<i64: 1, 128>}, {pipeline_mode = #tpu.pipeline_mode<synchronous>, transform_indices = @transform_5, window_bounds = array<i64: 128, 128>}, {pipeline_mode = #tpu.pipeline_mode<synchronous>, transform_indices = @transform_6, window_bounds = array<i64: 1, 128>}, {pipeline_mode = #tpu.pipeline_mode<synchronous>, transform_indices = @transform_7, window_bounds = array<i64: 128, 128>}, {pipeline_mode = #tpu.pipeline_mode<synchronous>, transform_indices = @transform_8, window_bounds = array<i64: 1, 128>}, {transform_indices = @transform_9, window_bounds = array<i64: 8, 128>}]} {
    %c0 = arith.constant 0 : index
    %c0_0 = arith.constant 0 : index
    %0 = vector.load %arg1[%c0, %c0_0] : memref<8x128xbf16, #tpu.memory_space<vmem>>, vector<8x128xbf16>
    %c0_1 = arith.constant 0 : index
    %c0_2 = arith.constant 0 : index
    %1 = vector.load %arg2[%c0_1, %c0_2] : memref<128x128xbf16, #tpu.memory_space<vmem>>, vector<128x128xbf16>
    %cst = arith.constant dense<0.000000e+00> : vector<8x128xf32>
    %2 = tpu.matmul %0, %1, %cst {dimension_numbers = #tpu.dot_dimension_numbers<[1], [0], [0], [1], [0, 0, 1, 1], [], []>} : vector<8x128xbf16>, vector<128x128xbf16>, vector<8x128xf32> -> vector<8x128xf32>
    %c0_3 = arith.constant 0 : index
    %c0_4 = arith.constant 0 : index
    %3 = vector.load %arg3[%c0_3, %c0_4] : memref<1x128xf32, #tpu.memory_space<vmem>>, vector<1x128xf32>
    %4 = vector.broadcast %3 : vector<1x128xf32> to vector<8x128xf32>
    %5 = arith.addf %2, %4 : vector<8x128xf32>
    %cst_5 = arith.constant 0.000000e+00 : f32
    %6 = vector.broadcast %cst_5 : f32 to vector<8x128xf32>
    %7 = arith.maximumf %5, %6 : vector<8x128xf32>
    %8 = arith.truncf %7 : vector<8x128xf32> to vector<8x128xbf16>
    %c0_6 = arith.constant 0 : index
    %c0_7 = arith.constant 0 : index
    %9 = vector.load %arg4[%c0_6, %c0_7] : memref<128x128xbf16, #tpu.memory_space<vmem>>, vector<128x128xbf16>
    %cst_8 = arith.constant dense<0.000000e+00> : vector<8x128xf32>
    %10 = tpu.matmul %8, %9, %cst_8 {dimension_numbers = #tpu.dot_dimension_numbers<[1], [0], [0], [1], [0, 0, 1, 1], [], []>} : vector<8x128xbf16>, vector<128x128xbf16>, vector<8x128xf32> -> vector<8x128xf32>
    %c0_9 = arith.constant 0 : index
    %c0_10 = arith.constant 0 : index
    %11 = vector.load %arg5[%c0_9, %c0_10] : memref<1x128xf32, #tpu.memory_space<vmem>>, vector<1x128xf32>
    %12 = vector.broadcast %11 : vector<1x128xf32> to vector<8x128xf32>
    %13 = arith.addf %10, %12 : vector<8x128xf32>
    %cst_11 = arith.constant 0.000000e+00 : f32
    %14 = vector.broadcast %cst_11 : f32 to vector<8x128xf32>
    %15 = arith.maximumf %13, %14 : vector<8x128xf32>
    %16 = arith.truncf %15 : vector<8x128xf32> to vector<8x128xbf16>
    %c0_12 = arith.constant 0 : index
    %c0_13 = arith.constant 0 : index
    %17 = vector.load %arg6[%c0_12, %c0_13] : memref<128x128xbf16, #tpu.memory_space<vmem>>, vector<128x128xbf16>
    %cst_14 = arith.constant dense<0.000000e+00> : vector<8x128xf32>
    %18 = tpu.matmul %16, %17, %cst_14 {dimension_numbers = #tpu.dot_dimension_numbers<[1], [0], [0], [1], [0, 0, 1, 1], [], []>} : vector<8x128xbf16>, vector<128x128xbf16>, vector<8x128xf32> -> vector<8x128xf32>
    %c0_15 = arith.constant 0 : index
    %c0_16 = arith.constant 0 : index
    %19 = vector.load %arg7[%c0_15, %c0_16] : memref<1x128xf32, #tpu.memory_space<vmem>>, vector<1x128xf32>
    %20 = vector.broadcast %19 : vector<1x128xf32> to vector<8x128xf32>
    %21 = arith.addf %18, %20 : vector<8x128xf32>
    %cst_17 = arith.constant 0.000000e+00 : f32
    %22 = vector.broadcast %cst_17 : f32 to vector<8x128xf32>
    %23 = arith.maximumf %21, %22 : vector<8x128xf32>
    %24 = arith.truncf %23 : vector<8x128xf32> to vector<8x128xbf16>
    %c0_18 = arith.constant 0 : index
    %c0_19 = arith.constant 0 : index
    %25 = vector.load %arg8[%c0_18, %c0_19] : memref<128x128xbf16, #tpu.memory_space<vmem>>, vector<128x128xbf16>
    %cst_20 = arith.constant dense<0.000000e+00> : vector<8x128xf32>
    %26 = tpu.matmul %24, %25, %cst_20 {dimension_numbers = #tpu.dot_dimension_numbers<[1], [0], [0], [1], [0, 0, 1, 1], [], []>} : vector<8x128xbf16>, vector<128x128xbf16>, vector<8x128xf32> -> vector<8x128xf32>
    %c0_21 = arith.constant 0 : index
    %c0_22 = arith.constant 0 : index
    %27 = vector.load %arg9[%c0_21, %c0_22] : memref<1x128xf32, #tpu.memory_space<vmem>>, vector<1x128xf32>
    %28 = vector.broadcast %27 : vector<1x128xf32> to vector<8x128xf32>
    %29 = arith.addf %26, %28 : vector<8x128xf32>
    %c0_23 = arith.constant 0 : index
    %c0_24 = arith.constant 0 : index
    %30 = vector.load %arg10[%c0_23, %c0_24] : memref<8x128xf32, #tpu.memory_space<vmem>>, vector<8x128xf32>
    tpu.vector_store %arg10[%c0_23, %c0_24], %29 {strides = array<i32>} : memref<8x128xf32, #tpu.memory_space<vmem>>, vector<8x128xf32>,
    return
  }
  func.func @transform_0(%arg0: i32) -> (i32, i32) {
    %c0_i32 = arith.constant 0 : i32
    %c0_i32_0 = arith.constant 0 : i32
    return %arg0, %c0_i32 : i32, i32
  }
  func.func @transform_1(%arg0: i32) -> (i32, i32) {
    %c0_i32 = arith.constant 0 : i32
    %c0_i32_0 = arith.constant 0 : i32
    %c0_i32_1 = arith.constant 0 : i32
    return %c0_i32, %c0_i32_0 : i32, i32
  }
  func.func @transform_2(%arg0: i32) -> (i32, i32) {
    %c0_i32 = arith.constant 0 : i32
    %c0_i32_0 = arith.constant 0 : i32
    %c0_i32_1 = arith.constant 0 : i32
    return %c0_i32, %c0_i32_0 : i32, i32
  }
  func.func @transform_3(%arg0: i32) -> (i32, i32) {
    %c0_i32 = arith.constant 0 : i32
    %c0_i32_0 = arith.constant 0 : i32
    %c0_i32_1 = arith.constant 0 : i32
    return %c0_i32, %c0_i32_0 : i32, i32
  }
  func.func @transform_4(%arg0: i32) -> (i32, i32) {
    %c0_i32 = arith.constant 0 : i32
    %c0_i32_0 = arith.constant 0 : i32
    %c0_i32_1 = arith.constant 0 : i32
    return %c0_i32, %c0_i32_0 : i32, i32
  }
  func.func @transform_5(%arg0: i32) -> (i32, i32) {
    %c0_i32 = arith.constant 0 : i32
    %c0_i32_0 = arith.constant 0 : i32
    %c0_i32_1 = arith.constant 0 : i32
    return %c0_i32, %c0_i32_0 : i32, i32
  }
  func.func @transform_6(%arg0: i32) -> (i32, i32) {
    %c0_i32 = arith.constant 0 : i32
    %c0_i32_0 = arith.constant 0 : i32
    %c0_i32_1 = arith.constant 0 : i32
    return %c0_i32, %c0_i32_0 : i32, i32
  }
  func.func @transform_7(%arg0: i32) -> (i32, i32) {
    %c0_i32 = arith.constant 0 : i32
    %c0_i32_0 = arith.constant 0 : i32
    %c0_i32_1 = arith.constant 0 : i32
    return %c0_i32, %c0_i32_0 : i32, i32
  }
  func.func @transform_8(%arg0: i32) -> (i32, i32) {
    %c0_i32 = arith.constant 0 : i32
    %c0_i32_0 = arith.constant 0 : i32
    %c0_i32_1 = arith.constant 0 : i32
    return %c0_i32, %c0_i32_0 : i32, i32
  }
  func.func @transform_9(%arg0: i32) -> (i32, i32) {
    %c0_i32 = arith.constant 0 : i32
    %c0_i32_0 = arith.constant 0 : i32
    return %arg0, %c0_i32 : i32, i32
  }
}

module attributes {stable_mosaic.version = 11 : i64} {
  func.func @kernel(%arg0: i32, %arg1: memref<8x128xbf16, #tpu.memory_space<vmem>>, %arg2: memref<128x128xbf16, #tpu.memory_space<vmem>>, %arg3: memref<1x128xf32, #tpu.memory_space<vmem>>, %arg4: memref<128x128xbf16, #tpu.memory_space<vmem>>, %arg5: memref<1x128xf32, #tpu.memory_space<vmem>>, %arg6: memref<128x128xbf16, #tpu.memory_space<vmem>>, %arg7: memref<1x128xf32, #tpu.memory_space<vmem>>, %arg8: memref<128x128xbf16, #tpu.memory_space<vmem>>, %arg9: memref<1x128xf32, #tpu.memory_space<vmem>>, %arg10: memref<8x128xf32, #tpu.memory_space<vmem>>) attributes {dimension_semantics = [#tpu.dimension_semantics<parallel>], iteration_bounds = array<i64: 2>, scalar_prefetch = 0 : i64, scratch_operands = 0 : i64, tpu.core_type = #tpu.core_type<tc>, window_params = [{transform_indices = @transform_0, window_bounds = array<i64: 8, 128>}, {pipeline_mode = #tpu.pipeline_mode<synchronous>, transform_indices = @transform_1, window_bounds = array<i64: 128, 128>}, {pipeline_mode = #tpu.pipeline_mode<synchronous>, transform_indices = @transform_2, window_bounds = array<i64: 1, 128>}, {pipeline_mode = #tpu.pipeline_mode<synchronous>, transform_indices = @transform_3, window_bounds = array<i64: 128, 128>}, {pipeline_mode = #tpu.pipeline_mode<synchronous>, transform_indices = @transform_4, window_bounds = array<i64: 1, 128>}, {pipeline_mode = #tpu.pipeline_mode<synchronous>, transform_indices = @transform_5, window_bounds = array<i64: 128, 128>}, {pipeline_mode = #tpu.pipeline_mode<synchronous>, transform_indices = @transform_6, window_bounds = array<i64: 1, 128>}, {pipeline_mode = #tpu.pipeline_mode<synchronous>, transform_indices = @transform_7, window_bounds = array<i64: 128, 128>}, {pipeline_mode = #tpu.pipeline_mode<synchronous>, transform_indices = @transform_8, window_bounds = array<i64: 1, 128>}, {transform_indices = @transform_9, window_bounds = array<i64: 8, 128>}]} {
    %c0 = arith.constant 0 : index
    %c0_0 = arith.constant 0 : index
    %0 = vector.load %arg1[%c0, %c0_0] : memref<8x128xbf16, #tpu.memory_space<vmem>>, vector<8x128xbf16>
    %c0_1 = arith.constant 0 : index
    %c0_2 = arith.constant 0 : index
    %1 = vector.load %arg2[%c0_1, %c0_2] : memref<128x128xbf16, #tpu.memory_space<vmem>>, vector<128x128xbf16>
    %cst = arith.constant dense<0.000000e+00> : vector<8x128xf32>
    %2 = tpu.matmul %0, %1, %cst {dimension_numbers = #tpu.dot_dimension_numbers<[1], [0], [0], [1], [0, 0, 1, 1], [], []>} : vector<8x128xbf16>, vector<128x128xbf16>, vector<8x128xf32> -> vector<8x128xf32>
    %c0_3 = arith.constant 0 : index
    %c0_4 = arith.constant 0 : index
    %3 = vector.load %arg3[%c0_3, %c0_4] : memref<1x128xf32, #tpu.memory_space<vmem>>, vector<1x128xf32>
    %4 = vector.broadcast %3 : vector<1x128xf32> to vector<8x128xf32>
    %5 = arith.addf %2, %4 : vector<8x128xf32>
    %cst_5 = arith.constant 0.000000e+00 : f32
    %6 = vector.broadcast %cst_5 : f32 to vector<8x128xf32>
    %7 = arith.maximumf %5, %6 : vector<8x128xf32>
    %8 = arith.truncf %7 : vector<8x128xf32> to vector<8x128xbf16>
    %c0_6 = arith.constant 0 : index
    %c0_7 = arith.constant 0 : index
    %9 = vector.load %arg4[%c0_6, %c0_7] : memref<128x128xbf16, #tpu.memory_space<vmem>>, vector<128x128xbf16>
    %cst_8 = arith.constant dense<0.000000e+00> : vector<8x128xf32>
    %10 = tpu.matmul %8, %9, %cst_8 {dimension_numbers = #tpu.dot_dimension_numbers<[1], [0], [0], [1], [0, 0, 1, 1], [], []>} : vector<8x128xbf16>, vector<128x128xbf16>, vector<8x128xf32> -> vector<8x128xf32>
    %c0_9 = arith.constant 0 : index
    %c0_10 = arith.constant 0 : index
    %11 = vector.load %arg5[%c0_9, %c0_10] : memref<1x128xf32, #tpu.memory_space<vmem>>, vector<1x128xf32>
    %12 = vector.broadcast %11 : vector<1x128xf32> to vector<8x128xf32>
    %13 = arith.addf %10, %12 : vector<8x128xf32>
    %cst_11 = arith.constant 0.000000e+00 : f32
    %14 = vector.broadcast %cst_11 : f32 to vector<8x128xf32>
    %15 = arith.maximumf %13, %14 : vector<8x128xf32>
    %16 = arith.truncf %15 : vector<8x128xf32> to vector<8x128xbf16>
    %c0_12 = arith.constant 0 : index
    %c0_13 = arith.constant 0 : index
    %17 = vector.load %arg6[%c0_12, %c0_13] : memref<128x128xbf16, #tpu.memory_space<vmem>>, vector<128x128xbf16>
    %cst_14 = arith.constant dense<0.000000e+00> : vector<8x128xf32>
    %18 = tpu.matmul %16, %17, %cst_14 {dimension_numbers = #tpu.dot_dimension_numbers<[1], [0], [0], [1], [0, 0, 1, 1], [], []>} : vector<8x128xbf16>, vector<128x128xbf16>, vector<8x128xf32> -> vector<8x128xf32>
    %c0_15 = arith.constant 0 : index
    %c0_16 = arith.constant 0 : index
    %19 = vector.load %arg7[%c0_15, %c0_16] : memref<1x128xf32, #tpu.memory_space<vmem>>, vector<1x128xf32>
    %20 = vector.broadcast %19 : vector<1x128xf32> to vector<8x128xf32>
    %21 = arith.addf %18, %20 : vector<8x128xf32>
    %cst_17 = arith.constant 0.000000e+00 : f32
    %22 = vector.broadcast %cst_17 : f32 to vector<8x128xf32>
    %23 = arith.maximumf %21, %22 : vector<8x128xf32>
    %24 = arith.truncf %23 : vector<8x128xf32> to vector<8x128xbf16>
    %c0_18 = arith.constant 0 : index
    %c0_19 = arith.constant 0 : index
    %25 = vector.load %arg8[%c0_18, %c0_19] : memref<128x128xbf16, #tpu.memory_space<vmem>>, vector<128x128xbf16>
    %cst_20 = arith.constant dense<0.000000e+00> : vector<8x128xf32>
    %26 = tpu.matmul %24, %25, %cst_20 {dimension_numbers = #tpu.dot_dimension_numbers<[1], [0], [0], [1], [0, 0, 1, 1], [], []>} : vector<8x128xbf16>, vector<128x128xbf16>, vector<8x128xf32> -> vector<8x128xf32>
    %c0_21 = arith.constant 0 : index
    %c0_22 = arith.constant 0 : index
    %27 = vector.load %arg9[%c0_21, %c0_22] : memref<1x128xf32, #tpu.memory_space<vmem>>, vector<1x128xf32>
    %28 = vector.broadcast %27 : vector<1x128xf32> to vector<8x128xf32>
    %29 = arith.addf %26, %28 : vector<8x128xf32>
    %c0_23 = arith.constant 0 : index
    %c0_24 = arith.constant 0 : index
    %30 = vector.load %arg10[%c0_23, %c0_24] : memref<8x128xf32, #tpu.memory_space<vmem>>, vector<8x128xf32>
    tpu.vector_store %arg10[%c0_23, %c0_24], %29 {strides = array<i32>} : memref<8x128xf32, #tpu.memory_space<vmem>>, vector<8x128xf32>,
    return
  }
  func.func @transform_0(%arg0: i32) -> (i32, i32) {
    %c0_i32 = arith.constant 0 : i32
    %c0_i32_0 = arith.constant 0 : i32
    return %arg0, %c0_i32 : i32, i32
  }
  func.func @transform_1(%arg0: i32) -> (i32, i32) {
    %c0_i32 = arith.constant 0 : i32
    %c0_i32_0 = arith.constant 0 : i32
    %c0_i32_1 = arith.constant 0 : i32
    return %c0_i32, %c0_i32_0 : i32, i32
  }
  func.func @transform_2(%arg0: i32) -> (i32, i32) {
    %c0_i32 = arith.constant 0 : i32
    %c0_i32_0 = arith.constant 0 : i32
    %c0_i32_1 = arith.constant 0 : i32
    return %c0_i32, %c0_i32_0 : i32, i32
  }
  func.func @transform_3(%arg0: i32) -> (i32, i32) {
    %c0_i32 = arith.constant 0 : i32
    %c0_i32_0 = arith.constant 0 : i32
    %c0_i32_1 = arith.constant 0 : i32
    return %c0_i32, %c0_i32_0 : i32, i32
  }
  func.func @transform_4(%arg0: i32) -> (i32, i32) {
    %c0_i32 = arith.constant 0 : i32
    %c0_i32_0 = arith.constant 0 : i32
    %c0_i32_1 = arith.constant 0 : i32
    return %c0_i32, %c0_i32_0 : i32, i32
  }
  func.func @transform_5(%arg0: i32) -> (i32, i32) {
    %c0_i32 = arith.constant 0 : i32
    %c0_i32_0 = arith.constant 0 : i32
    %c0_i32_1 = arith.constant 0 : i32
    return %c0_i32, %c0_i32_0 : i32, i32
  }
  func.func @transform_6(%arg0: i32) -> (i32, i32) {
    %c0_i32 = arith.constant 0 : i32
    %c0_i32_0 = arith.constant 0 : i32
    %c0_i32_1 = arith.constant 0 : i32
    return %c0_i32, %c0_i32_0 : i32, i32
  }
  func.func @transform_7(%arg0: i32) -> (i32, i32) {
    %c0_i32 = arith.constant 0 : i32
    %c0_i32_0 = arith.constant 0 : i32
    %c0_i32_1 = arith.constant 0 : i32
    return %c0_i32, %c0_i32_0 : i32, i32
  }
  func.func @transform_8(%arg0: i32) -> (i32, i32) {
    %c0_i32 = arith.constant 0 : i32
    %c0_i32_0 = arith.constant 0 : i32
    %c0_i32_1 = arith.constant 0 : i32
    return %c0_i32, %c0_i32_0 : i32, i32
  }
  func.func @transform_9(%arg0: i32) -> (i32, i32) {
    %c0_i32 = arith.constant 0 : i32
    %c0_i32_0 = arith.constant 0 : i32
    return %arg0, %c0_i32 : i32, i32
  }
}

</mosaic_0001>

<llo_original>
// kernel: tpu_custom_call.1
$region0: #{tpu_custom_call.1}
  #allocation0 [shape = 'u32[]', space=smem, size = 0x4, offset = 0x4, fixed_abs, tag = 'smem constant byte address 0x4 - core index']
  #allocation1 [shape = 'u32[72,128]{1,0:T(1,128)}', space=vmem, size = 0x9000, scoped, tag = 'internal scratch']
  %s0 = inlined_call_operand.hbm [shape: bf16[16,128], index: 0, kind: input, shape index: {}]
  %s1 = inlined_call_operand.hbm [shape: bf16[128,128], index: 1, kind: input, shape index: {}]
  %s2 = inlined_call_operand.vmem [shape: f32[1,128], index: 2, kind: input, shape index: {}]
  %s3 = inlined_call_operand.hbm [shape: bf16[128,128], index: 3, kind: input, shape index: {}]
  %s4 = inlined_call_operand.vmem [shape: f32[1,128], index: 4, kind: input, shape index: {}]
  %s5 = inlined_call_operand.hbm [shape: bf16[128,128], index: 5, kind: input, shape index: {}]
  %s6 = inlined_call_operand.vmem [shape: f32[1,128], index: 6, kind: input, shape index: {}]
  %s7 = inlined_call_operand.hbm [shape: bf16[128,128], index: 7, kind: input, shape index: {}]
  %s8 = inlined_call_operand.vmem [shape: f32[1,128], index: 8, kind: input, shape index: {}]
  %s9 = inlined_call_operand.hbm [shape: f32[16,128], index: 9, kind: output, shape index: {}]
  %s10 = sld [smem:[#allocation0]]
  $region89: #{tpu_custom_call.1} parent=0
    _
  %s12 = ssub.s32 1, %s10
  %s13 = scalar_select 0, %s12, %s10
  $region1: #{tpu_custom_call.1} parent=0
    #allocation2 [shape = 'u8[4096]{0}', space=vmem, size = 0x1000, scoped, tag = 'input window, operand 0']
    #allocation3 [shape = 's32[2]{0}', space=sflag, size = 0x8, scoped, tag = 'scoped memory for tpu_custom_call.1']
    #allocation4 [shape = 's32[2]{0}', space=sflag, size = 0x8, scoped, tag = 'scoped memory for tpu_custom_call.1']
    #allocation5 [shape = 'u8[32768]{0}', space=vmem, size = 0x8000, scoped, tag = 'input window, operand 1, single buffered']
    #allocation6 [shape = 's32[1]{0}', space=sflag, size = 0x4, scoped, tag = 'scoped memory for tpu_custom_call.1']
    #allocation7 [shape = 'u8[32768]{0}', space=vmem, size = 0x8000, scoped, tag = 'input window, operand 3, single buffered']
    #allocation8 [shape = 'u8[32768]{0}', space=vmem, size = 0x8000, scoped, tag = 'input window, operand 5, single buffered']
    #allocation9 [shape = 's32[1]{0}', space=sflag, size = 0x4, scoped, tag = 'scoped memory for tpu_custom_call.1']
    #allocation10 [shape = 'u8[32768]{0}', space=vmem, size = 0x8000, scoped, tag = 'input window, operand 7, single buffered']
    #allocation11 [shape = 'u8[8192]{0}', space=vmem, size = 0x2000, scoped, tag = 'output window, operand 0']
    %14 = vsyncpa [#allocation3], 0
    %s15 = scalar_lea.sflag [#allocation3], 1
    %16 = vsyncpa %s15, 0
    %17 = vsyncpa [#allocation6], 0
    %18 = vsyncpa [#allocation9], 0
    %19 = vsyncpa [#allocation4], 0
    %s20 = scalar_lea.sflag [#allocation4], 1
    %21 = vsyncpa %s20, 0
    loop: start=0, step=1, limit=4
    $region2: #{tpu_custom_call.1} parent=1 // loop_pre_header
      _
    $region3: #{tpu_custom_call.1} parent=1 // loop_header
      %s23 = sphi 0, %s27
      %p24 = scmp.ge.s32.totalorder %s23, 4
      %s33 = sphi 0, %s35
      %s36 = sphi 0, %s33
      %s37 = sphi 0, %s36
      %s53 = sphi 0, %s37
      %s57 = sphi 0, %s57
      %s59 = sphi 0, %s57
      %s60 = sphi 0, %s59
      %s74 = sphi 0, %s60
      %s78 = sphi 0, %s78
      %s80 = sphi 0, %s78
      %s81 = sphi 0, %s80
      %s95 = sphi 0, %s81
      %s99 = sphi 0, %s99
      %s101 = sphi 0, %s99
      %s102 = sphi 0, %s101
      %s116 = sphi 0, %s102
      %s120 = sphi 0, %s120
      %s122 = sphi 0, %s120
      %s123 = sphi 0, %s122
      %s137 = sphi 0, %s123
      %s141 = sphi 0, %s141
      %s143 = sphi 0, %s141
      %s144 = sphi 0, %s143
      %s158 = sphi 0, %s144
      %s162 = sphi 0, %s162
      %s164 = sphi 0, %s162
      %s165 = sphi 0, %s164
      %s179 = sphi 0, %s165
      %s183 = sphi 0, %s183
      %s185 = sphi 0, %s183
      %s186 = sphi 0, %s185
      %s200 = sphi 0, %s186
      %s204 = sphi 0, %s204
      %s206 = sphi 0, %s204
      %s207 = sphi 0, %s206
      %s221 = sphi 0, %s207
      %s227 = sphi 0, %s229
      %s230 = sphi 0, %s227
      %s231 = sphi 0, %s230
      %s247 = sphi 0, %s231
    $region4: #{tpu_custom_call.1} parent=1 // loop_header_branch
      %26 = sbr.rel (%p24) target = $region8
    $region5: #{tpu_custom_call.1} parent=1 // loop_body
      %s28 = ssub.s32 %s23, 1
      %s29 = ssub.s32 %s23, 2
      %s30 = sadd.s32 %s23, 1
      %s31 = ssub.s32 %s23, %s30
      %p32 = scmp.eq.s32.totalorder %s31, 0
      %s34 = sadd.s32 %s33, 1
      %s35 = scalar_select %p32, %s33, %s34
      %p38 = pneg %p32
      %p39 = scmp.eq.s32.totalorder %s23, 1
      %p40 = por %p38, %p39
      %p41 = scmp.ne.s32.totalorder %s33, %s36
      %p42 = scmp.eq.s32.totalorder %s23, 0
      %p43 = por %p41, %p42
      %p44 = scmp.ne.s32.totalorder %s33, %s36
      %p45 = scmp.eq.s32.totalorder %s28, 1
      %p46 = por %p44, %p45
      %p47 = scmp.ne.s32.totalorder %s36, %s37
      %p48 = scmp.eq.s32.totalorder %s28, 0
      %p49 = por %p47, %p48
      %p50 = scmp.ne.s32.totalorder %s36, %s37
      %p51 = scmp.eq.s32.totalorder %s29, 1
      %p52 = por %p50, %p51
      %p54 = scmp.ne.s32.totalorder %s37, %s53
      %p55 = scmp.eq.s32.totalorder %s29, 0
      %p56 = por %p54, %p55
      %s58 = sadd.s32 %s57, 1
      %p61 = scmp.eq.s32.totalorder %s23, 1
      %p62 = scmp.ne.s32.totalorder %s57, %s59
      %p63 = scmp.eq.s32.totalorder %s23, 0
      %p64 = por %p62, %p63
      %p65 = scmp.ne.s32.totalorder %s57, %s59
      %p66 = scmp.eq.s32.totalorder %s28, 1
      %p67 = por %p65, %p66
      %p68 = scmp.ne.s32.totalorder %s59, %s60
      %p69 = scmp.eq.s32.totalorder %s28, 0
      %p70 = por %p68, %p69
      %p71 = scmp.ne.s32.totalorder %s59, %s60
      %p72 = scmp.eq.s32.totalorder %s29, 1
      %p73 = por %p71, %p72
      %p75 = scmp.ne.s32.totalorder %s60, %s74
      %p76 = scmp.eq.s32.totalorder %s29, 0
      %p77 = por %p75, %p76
      %s79 = sadd.s32 %s78, 1
      %p82 = scmp.eq.s32.totalorder %s23, 1
      %p83 = scmp.ne.s32.totalorder %s78, %s80
      %p84 = scmp.eq.s32.totalorder %s23, 0
      %p85 = por %p83, %p84
      %p86 = scmp.ne.s32.totalorder %s78, %s80
      %p87 = scmp.eq.s32.totalorder %s28, 1
      %p88 = por %p86, %p87
      %p89 = scmp.ne.s32.totalorder %s80, %s81
      %p90 = scmp.eq.s32.totalorder %s28, 0
      %p91 = por %p89, %p90
      %p92 = scmp.ne.s32.totalorder %s80, %s81
      %p93 = scmp.eq.s32.totalorder %s29, 1
      %p94 = por %p92, %p93
      %p96 = scmp.ne.s32.totalorder %s81, %s95
      %p97 = scmp.eq.s32.totalorder %s29, 0
      %p98 = por %p96, %p97
      %s100 = sadd.s32 %s99, 1
      %p103 = scmp.eq.s32.totalorder %s23, 1
      %p104 = scmp.ne.s32.totalorder %s99, %s101
      %p105 = scmp.eq.s32.totalorder %s23, 0
      %p106 = por %p104, %p105
      %p107 = scmp.ne.s32.totalorder %s99, %s101
      %p108 = scmp.eq.s32.totalorder %s28, 1
      %p109 = por %p107, %p108
      %p110 = scmp.ne.s32.totalorder %s101, %s102
      %p111 = scmp.eq.s32.totalorder %s28, 0
      %p112 = por %p110, %p111
      %p113 = scmp.ne.s32.totalorder %s101, %s102
      %p114 = scmp.eq.s32.totalorder %s29, 1
      %p115 = por %p113, %p114
      %p117 = scmp.ne.s32.totalorder %s102, %s116
      %p118 = scmp.eq.s32.totalorder %s29, 0
      %p119 = por %p117, %p118
      %s121 = sadd.s32 %s120, 1
      %p124 = scmp.eq.s32.totalorder %s23, 1
      %p125 = scmp.ne.s32.totalorder %s120, %s122
      %p126 = scmp.eq.s32.totalorder %s23, 0
      %p127 = por %p125, %p126
      %p128 = scmp.ne.s32.totalorder %s120, %s122
      %p129 = scmp.eq.s32.totalorder %s28, 1
      %p130 = por %p128, %p129
      %p131 = scmp.ne.s32.totalorder %s122, %s123
      %p132 = scmp.eq.s32.totalorder %s28, 0
      %p133 = por %p131, %p132
      %p134 = scmp.ne.s32.totalorder %s122, %s123
      %p135 = scmp.eq.s32.totalorder %s29, 1
      %p136 = por %p134, %p135
      %p138 = scmp.ne.s32.totalorder %s123, %s137
      %p139 = scmp.eq.s32.totalorder %s29, 0
      %p140 = por %p138, %p139
      %s142 = sadd.s32 %s141, 1
      %p145 = scmp.eq.s32.totalorder %s23, 1
      %p146 = scmp.ne.s32.totalorder %s141, %s143
      %p147 = scmp.eq.s32.totalorder %s23, 0
      %p148 = por %p146, %p147
      %p149 = scmp.ne.s32.totalorder %s141, %s143
      %p150 = scmp.eq.s32.totalorder %s28, 1
      %p151 = por %p149, %p150
      %p152 = scmp.ne.s32.totalorder %s143, %s144
      %p153 = scmp.eq.s32.totalorder %s28, 0
      %p154 = por %p152, %p153
      %p155 = scmp.ne.s32.totalorder %s143, %s144
      %p156 = scmp.eq.s32.totalorder %s29, 1
      %p157 = por %p155, %p156
      %p159 = scmp.ne.s32.totalorder %s144, %s158
      %p160 = scmp.eq.s32.totalorder %s29, 0
      %p161 = por %p159, %p160
      %s163 = sadd.s32 %s162, 1
      %p166 = scmp.eq.s32.totalorder %s23, 1
      %p167 = scmp.ne.s32.totalorder %s162, %s164
      %p168 = scmp.eq.s32.totalorder %s23, 0
      %p169 = por %p167, %p168
      %p170 = scmp.ne.s32.totalorder %s162, %s164
      %p171 = scmp.eq.s32.totalorder %s28, 1
      %p172 = por %p170, %p171
      %p173 = scmp.ne.s32.totalorder %s164, %s165
      %p174 = scmp.eq.s32.totalorder %s28, 0
      %p175 = por %p173, %p174
      %p176 = scmp.ne.s32.totalorder %s164, %s165
      %p177 = scmp.eq.s32.totalorder %s29, 1
      %p178 = por %p176, %p177
      %p180 = scmp.ne.s32.totalorder %s165, %s179
      %p181 = scmp.eq.s32.totalorder %s29, 0
      %p182 = por %p180, %p181
      %s184 = sadd.s32 %s183, 1
      %p187 = scmp.eq.s32.totalorder %s23, 1
      %p188 = scmp.ne.s32.totalorder %s183, %s185
      %p189 = scmp.eq.s32.totalorder %s23, 0
      %p190 = por %p188, %p189
      %p191 = scmp.ne.s32.totalorder %s183, %s185
      %p192 = scmp.eq.s32.totalorder %s28, 1
      %p193 = por %p191, %p192
      %p194 = scmp.ne.s32.totalorder %s185, %s186
      %p195 = scmp.eq.s32.totalorder %s28, 0
      %p196 = por %p194, %p195
      %p197 = scmp.ne.s32.totalorder %s185, %s186
      %p198 = scmp.eq.s32.totalorder %s29, 1
      %p199 = por %p197, %p198
      %p201 = scmp.ne.s32.totalorder %s186, %s200
      %p202 = scmp.eq.s32.totalorder %s29, 0
      %p203 = por %p201, %p202
      %s205 = sadd.s32 %s204, 1
      %p208 = scmp.eq.s32.totalorder %s23, 1
      %p209 = scmp.ne.s32.totalorder %s204, %s206
      %p210 = scmp.eq.s32.totalorder %s23, 0
      %p211 = por %p209, %p210
      %p212 = scmp.ne.s32.totalorder %s204, %s206
      %p213 = scmp.eq.s32.totalorder %s28, 1
      %p214 = por %p212, %p213
      %p215 = scmp.ne.s32.totalorder %s206, %s207
      %p216 = scmp.eq.s32.totalorder %s28, 0
      %p217 = por %p215, %p216
      %p218 = scmp.ne.s32.totalorder %s206, %s207
      %p219 = scmp.eq.s32.totalorder %s29, 1
      %p220 = por %p218, %p219
      %p222 = scmp.ne.s32.totalorder %s207, %s221
      %p223 = scmp.eq.s32.totalorder %s29, 0
      %p224 = por %p222, %p223
      %s225 = ssub.s32 %s23, %s30
      %p226 = scmp.eq.s32.totalorder %s225, 0
      %s228 = sadd.s32 %s227, 1
      %s229 = scalar_select %p226, %s227, %s228
      %p232 = pneg %p226
      %p233 = scmp.eq.s32.totalorder %s23, 1
      %p234 = por %p232, %p233
      %p235 = scmp.ne.s32.totalorder %s227, %s230
      %p236 = scmp.eq.s32.totalorder %s23, 0
      %p237 = por %p235, %p236
      %p238 = scmp.ne.s32.totalorder %s227, %s230
      %p239 = scmp.eq.s32.totalorder %s28, 1
      %p240 = por %p238, %p239
      %p241 = scmp.ne.s32.totalorder %s230, %s231
      %p242 = scmp.eq.s32.totalorder %s28, 0
      %p243 = por %p241, %p242
      %p244 = scmp.ne.s32.totalorder %s230, %s231
      %p245 = scmp.eq.s32.totalorder %s29, 1
      %p246 = por %p244, %p245
      %p248 = scmp.ne.s32.totalorder %s231, %s247
      %p249 = scmp.eq.s32.totalorder %s29, 0
      %p250 = por %p248, %p249
      %p251 = scmp.le.s32.totalorder 1, %s23
      %p252 = scmp.lt.s32.totalorder %s23, 3
      %p253 = pnand %p251, %p252
      %p254 = pneg %p253
      // Predicated region
      $region9: #{tpu_custom_call.1} parent=5 // pred_check
        _
      $region10: #{tpu_custom_call.1} parent=5 // pred_check_branch
        %256 = sbr.rel (%p253) target = $region12
      $region11: #{tpu_custom_call.1} parent=5 // pred_region
        %s257 = ssub.s32 %s23, 1
        // Predicated region
        $region13: #{tpu_custom_call.1} parent=11 // pred_check
          %p258 = pneg %p70
        $region14: #{tpu_custom_call.1} parent=11 // pred_check_branch
          %260 = sbr.rel (%p258) target = $region16
        $region15: #{tpu_custom_call.1} parent=11 // pred_region
          %262 = vsyncadd [#allocation6], 0
          %s263 = sshll.u32 %s1, 4
          %s264 = int_to_ptr.hbm [resolvable:$true] %s263
          %s265 = sshll.u32 [#allocation5], 4
          %s266 = int_to_ptr.vmem [resolvable:$true] %s265
          %271 = dma.hbm_to_vmem [thread:$0]  %s264, 1024, %s266, [#allocation6], 64, 64, 4
        $region16: #{tpu_custom_call.1} parent=11 // pred_fallthru
          _
        // Predicated region
        $region17: #{tpu_custom_call.1} parent=11 // pred_check
          %p272 = pneg %p91
        $region18: #{tpu_custom_call.1} parent=11 // pred_check_branch
          %274 = sbr.rel (%p272) target = $region20
        $region19: #{tpu_custom_call.1} parent=11 // pred_region
          _
        $region20: #{tpu_custom_call.1} parent=11 // pred_fallthru
          _
        // Predicated region
        $region21: #{tpu_custom_call.1} parent=11 // pred_check
          %p275 = pneg %p112
        $region22: #{tpu_custom_call.1} parent=11 // pred_check_branch
          %277 = sbr.rel (%p275) target = $region24
        $region23: #{tpu_custom_call.1} parent=11 // pred_region
          %279 = vsyncadd [#allocation6], 0
          %s280 = sshll.u32 %s3, 4
          %s281 = int_to_ptr.hbm [resolvable:$true] %s280
          %s282 = sshll.u32 [#allocation7], 4
          %s283 = int_to_ptr.vmem [resolvable:$true] %s282
          %288 = dma.hbm_to_vmem [thread:$0]  %s281, 1024, %s283, [#allocation6], 64, 64, 4
        $region24: #{tpu_custom_call.1} parent=11 // pred_fallthru
          _
        // Predicated region
        $region25: #{tpu_custom_call.1} parent=11 // pred_check
          %p289 = pneg %p133
        $region26: #{tpu_custom_call.1} parent=11 // pred_check_branch
          %291 = sbr.rel (%p289) target = $region28
        $region27: #{tpu_custom_call.1} parent=11 // pred_region
          _
        $region28: #{tpu_custom_call.1} parent=11 // pred_fallthru
          _
        // Predicated region
        $region29: #{tpu_custom_call.1} parent=11 // pred_check
          %p292 = pneg %p154
        $region30: #{tpu_custom_call.1} parent=11 // pred_check_branch
          %294 = sbr.rel (%p292) target = $region32
        $region31: #{tpu_custom_call.1} parent=11 // pred_region
          %296 = vsyncadd [#allocation9], 0
          %s297 = sshll.u32 %s5, 4
          %s298 = int_to_ptr.hbm [resolvable:$true] %s297
          %s299 = sshll.u32 [#allocation8], 4
          %s300 = int_to_ptr.vmem [resolvable:$true] %s299
          %305 = dma.hbm_to_vmem [thread:$0]  %s298, 1024, %s300, [#allocation9], 64, 64, 4
        $region32: #{tpu_custom_call.1} parent=11 // pred_fallthru
          _
        // Predicated region
        $region33: #{tpu_custom_call.1} parent=11 // pred_check
          %p306 = pneg %p175
        $region34: #{tpu_custom_call.1} parent=11 // pred_check_branch
          %308 = sbr.rel (%p306) target = $region36
        $region35: #{tpu_custom_call.1} parent=11 // pred_region
          _
        $region36: #{tpu_custom_call.1} parent=11 // pred_fallthru
          _
        // Predicated region
        $region37: #{tpu_custom_call.1} parent=11 // pred_check
          %p309 = pneg %p196
        $region38: #{tpu_custom_call.1} parent=11 // pred_check_branch
          %311 = sbr.rel (%p309) target = $region40
        $region39: #{tpu_custom_call.1} parent=11 // pred_region
          %313 = vsyncadd [#allocation9], 0
          %s314 = sshll.u32 %s7, 4
          %s315 = int_to_ptr.hbm [resolvable:$true] %s314
          %s316 = sshll.u32 [#allocation10], 4
          %s317 = int_to_ptr.vmem [resolvable:$true] %s316
          %322 = dma.hbm_to_vmem [thread:$0]  %s315, 1024, %s317, [#allocation9], 64, 64, 4
        $region40: #{tpu_custom_call.1} parent=11 // pred_fallthru
          _
        // Predicated region
        $region41: #{tpu_custom_call.1} parent=11 // pred_check
          %p323 = pneg %p217
        $region42: #{tpu_custom_call.1} parent=11 // pred_check_branch
          %325 = sbr.rel (%p323) target = $region44
        $region43: #{tpu_custom_call.1} parent=11 // pred_region
          _
        $region44: #{tpu_custom_call.1} parent=11 // pred_fallthru
          _
      $region12: #{tpu_custom_call.1} parent=5 // pred_fallthru
        _
      %p326 = scmp.lt.s32.totalorder %s23, 2
      // Predicated region
      $region45: #{tpu_custom_call.1} parent=5 // pred_check
        %p327 = pneg %p326
      $region46: #{tpu_custom_call.1} parent=5 // pred_check_branch
        %329 = sbr.rel (%p327) target = $region48
      $region47: #{tpu_custom_call.1} parent=5 // pred_region
        // Predicated region
        $region49: #{tpu_custom_call.1} parent=47 // pred_check
          %p330 = pneg %p43
        $region50: #{tpu_custom_call.1} parent=47 // pred_check_branch
          %332 = sbr.rel (%p330) target = $region52
        $region51: #{tpu_custom_call.1} parent=47 // pred_region
          %s333 = sand.u32 %s33, 1
          %s334 = scalar_lea.sflag [#allocation3], %s333
          %s335 = sand.u32 %s33, 1
          %s336 = smul.addr %s335, 4
          %s337 = scalar_lea.vmem [#allocation2], %s336
          %339 = vsyncadd %s334, 0
          %s340 = smul.addr %s23, 4
          %s341 = scalar_lea.hbm %s0, %s340
          %s343 = sshll.u32 %s341, 4
          %s344 = int_to_ptr.hbm [resolvable:$true] %s343
          %s345 = sshll.u32 %s337, 4
          %s346 = int_to_ptr.vmem [resolvable:$true] %s345
          %348 = dma.hbm_to_vmem [thread:$0]  %s344, 64, %s346, %s334
        $region52: #{tpu_custom_call.1} parent=47 // pred_fallthru
          _
      $region48: #{tpu_custom_call.1} parent=5 // pred_fallthru
        _
      %p349 = scmp.le.s32.totalorder 1, %s23
      %p350 = scmp.lt.s32.totalorder %s23, 3
      %p351 = pnand %p349, %p350
      %p352 = pneg %p351
      // Predicated region
      $region53: #{tpu_custom_call.1} parent=5 // pred_check
        _
      $region54: #{tpu_custom_call.1} parent=5 // pred_check_branch
        %354 = sbr.rel (%p351) target = $region56
      $region55: #{tpu_custom_call.1} parent=5 // pred_region
        %s355 = ssub.s32 %s23, 1
        %s356 = sand.u32 %s36, 1
        %s357 = scalar_lea.sflag [#allocation3], %s356
        %s358 = sand.u32 %s36, 1
        %s359 = smul.addr %s358, 4
        %s360 = scalar_lea.vmem [#allocation2], %s359
        // Predicated region
        $region57: #{tpu_custom_call.1} parent=55 // pred_check
          %p361 = pneg %p49
        $region58: #{tpu_custom_call.1} parent=55 // pred_check_branch
          %363 = sbr.rel (%p361) target = $region60
        $region59: #{tpu_custom_call.1} parent=55 // pred_region
          %365 = dma.done %s357, 64
        $region60: #{tpu_custom_call.1} parent=55 // pred_fallthru
          _
        // Predicated region
        $region61: #{tpu_custom_call.1} parent=55 // pred_check
          %p366 = pneg %p70
        $region62: #{tpu_custom_call.1} parent=55 // pred_check_branch
          %368 = sbr.rel (%p366) target = $region64
        $region63: #{tpu_custom_call.1} parent=55 // pred_region
          %370 = dma.done [#allocation6], 1024
        $region64: #{tpu_custom_call.1} parent=55 // pred_fallthru
          _
        // Predicated region
        $region65: #{tpu_custom_call.1} parent=55 // pred_check
          %p371 = pneg %p112
        $region66: #{tpu_custom_call.1} parent=55 // pred_check_branch
          %373 = sbr.rel (%p371) target = $region68
        $region67: #{tpu_custom_call.1} parent=55 // pred_region
          %375 = dma.done [#allocation6], 1024
        $region68: #{tpu_custom_call.1} parent=55 // pred_fallthru
          _
        // Predicated region
        $region69: #{tpu_custom_call.1} parent=55 // pred_check
          %p376 = pneg %p154
        $region70: #{tpu_custom_call.1} parent=55 // pred_check_branch
          %378 = sbr.rel (%p376) target = $region72
        $region71: #{tpu_custom_call.1} parent=55 // pred_region
          %380 = dma.done [#allocation9], 1024
        $region72: #{tpu_custom_call.1} parent=55 // pred_fallthru
          _
        // Predicated region
        $region73: #{tpu_custom_call.1} parent=55 // pred_check
          %p381 = pneg %p196
        $region74: #{tpu_custom_call.1} parent=55 // pred_check_branch
          %383 = sbr.rel (%p381) target = $region76
        $region75: #{tpu_custom_call.1} parent=55 // pred_region
          %385 = dma.done [#allocation9], 1024
        $region76: #{tpu_custom_call.1} parent=55 // pred_fallthru
          _
        %s386 = sand.u32 %s36, 1
        %s387 = scalar_lea.sflag [#allocation3], %s386
        %s388 = sand.u32 %s36, 1
        %s389 = smul.addr %s388, 4
        %s390 = scalar_lea.vmem [#allocation2], %s389
        %p391 = pneg %p49
        %p392 = pneg %p46
        %p393 = pneg %p70
        %p394 = pneg %p67
        %p395 = pneg %p91
        %p396 = pneg %p88
        %p397 = pneg %p112
        %p398 = pneg %p109
        %p399 = pneg %p133
        %p400 = pneg %p130
        %p401 = pneg %p154
        %p402 = pneg %p151
        %p403 = pneg %p175
        %p404 = pneg %p172
        %p405 = pneg %p196
        %p406 = pneg %p193
        %p407 = pneg %p217
        %p408 = pneg %p214
        %p409 = pneg %p243
        %p410 = pneg %p240
        %s411 = sand.u32 %s230, 1
        %s412 = scalar_lea.sflag [#allocation4], %s411
        %s413 = sand.u32 %s230, 1
        %s414 = smul.addr %s413, 8
        %s415 = scalar_lea.vmem [#allocation11], %s414
        %v416 = vld [vmem:[%s360] sm:$0xf]
        %v417 = vld [vmem:[#allocation5] sm:$0xf]
        %v418 = vld [vmem:[#allocation5 + $0x4] sm:$0xf]
        %v419 = vld [vmem:[#allocation5 + $0x8] sm:$0xf]
        %v420 = vld [vmem:[#allocation5 + $0xc] sm:$0xf]
        %v421 = vld [vmem:[#allocation5 + $0x10] sm:$0xf]
        %v422 = vld [vmem:[#allocation5 + $0x14] sm:$0xf]
        %v423 = vld [vmem:[#allocation5 + $0x18] sm:$0xf]
        %v424 = vld [vmem:[#allocation5 + $0x1c] sm:$0xf]
        %v425 = vld [vmem:[#allocation5 + $0x20] sm:$0xf]
        %v426 = vld [vmem:[#allocation5 + $0x24] sm:$0xf]
        %v427 = vld [vmem:[#allocation5 + $0x28] sm:$0xf]
        %v428 = vld [vmem:[#allocation5 + $0x2c] sm:$0xf]
        %v429 = vld [vmem:[#allocation5 + $0x30] sm:$0xf]
        %v430 = vld [vmem:[#allocation5 + $0x34] sm:$0xf]
        %v431 = vld [vmem:[#allocation5 + $0x38] sm:$0xf]
        %v432 = vld [vmem:[#allocation5 + $0x3c] sm:$0xf]
        %v433 = vld [vmem:[%s2] sm:$0x1]
        %v435 = vperm.slane %v433, 0
        %v453 = vunpack.c.l.b16 %v417
        %v454 = vunpack.c.l.b16 %v418
        %v455 = vunpack.c.l.b16 %v419
        %v456 = vunpack.c.l.b16 %v420
        %v457 = vunpack.c.l.b16 %v421
        %v458 = vunpack.c.l.b16 %v422
        %v459 = vunpack.c.l.b16 %v423
        %v460 = vunpack.c.l.b16 %v424
        %v461 = vunpack.c.l.b16 %v425
        %v462 = vunpack.c.l.b16 %v426
        %v463 = vunpack.c.l.b16 %v427
        %v464 = vunpack.c.l.b16 %v428
        %v465 = vunpack.c.l.b16 %v429
        %v466 = vunpack.c.l.b16 %v430
        %v467 = vunpack.c.l.b16 %v431
        %v468 = vunpack.c.l.b16 %v432
        %v469 = vpack.c.b16 %v454, %v453
        %v470 = vpack.c.b16 %v456, %v455
        %v471 = vpack.c.b16 %v458, %v457
        %v472 = vpack.c.b16 %v460, %v459
        %v473 = vpack.c.b16 %v462, %v461
        %v474 = vpack.c.b16 %v464, %v463
        %v475 = vpack.c.b16 %v466, %v465
        %v476 = vpack.c.b16 %v468, %v467
        %485 = vmatpush.bf16.msra.mxu0 %v476
        %486 = vmatpush.bf16.msra.mxu0 %v475
        %487 = vmatpush.bf16.msra.mxu0 %v474
        %488 = vmatpush.bf16.msra.mxu0 %v473
        %489 = vmatpush.bf16.msra.mxu0 %v472
        %490 = vmatpush.bf16.msra.mxu0 %v471
        %491 = vmatpush.bf16.msra.mxu0 %v470
        %492 = vmatpush.bf16.msra.mxu0 %v469
        %493 = vmatmul.bf16.gmra.mxu0 %v416
        %v494 = vpop.f32.mrf.mxu0
        %v495 = vadd.f32 %v435, %v494
        %v496 = vpop.f32.mrf.mxu0
        %497 = vdwg.mxu0
        %v498 = vmax.f32 %v495, 0.0
        %v499 = vpack.c.bf16 %v498, %v498
        %v500 = vld [vmem:[#allocation7] sm:$0xf]
        %v501 = vld [vmem:[#allocation7 + $0x4] sm:$0xf]
        %v502 = vld [vmem:[#allocation7 + $0x8] sm:$0xf]
        %v503 = vld [vmem:[#allocation7 + $0xc] sm:$0xf]
        %v504 = vld [vmem:[#allocation7 + $0x10] sm:$0xf]
        %v505 = vld [vmem:[#allocation7 + $0x14] sm:$0xf]
        %v506 = vld [vmem:[#allocation7 + $0x18] sm:$0xf]
        %v507 = vld [vmem:[#allocation7 + $0x1c] sm:$0xf]
        %v508 = vld [vmem:[#allocation7 + $0x20] sm:$0xf]
        %v509 = vld [vmem:[#allocation7 + $0x24] sm:$0xf]
        %v510 = vld [vmem:[#allocation7 + $0x28] sm:$0xf]
        %v511 = vld [vmem:[#allocation7 + $0x2c] sm:$0xf]
        %v512 = vld [vmem:[#allocation7 + $0x30] sm:$0xf]
        %v513 = vld [vmem:[#allocation7 + $0x34] sm:$0xf]
        %v514 = vld [vmem:[#allocation7 + $0x38] sm:$0xf]
        %v515 = vld [vmem:[#allocation7 + $0x3c] sm:$0xf]
        %v516 = vld [vmem:[%s4] sm:$0x1]
        %v518 = vperm.slane %v516, 0
        %v536 = vunpack.c.l.b16 %v500
        %v537 = vunpack.c.l.b16 %v501
        %v538 = vunpack.c.l.b16 %v502
        %v539 = vunpack.c.l.b16 %v503
        %v540 = vunpack.c.l.b16 %v504
        %v541 = vunpack.c.l.b16 %v505
        %v542 = vunpack.c.l.b16 %v506
        %v543 = vunpack.c.l.b16 %v507
        %v544 = vunpack.c.l.b16 %v508
        %v545 = vunpack.c.l.b16 %v509
        %v546 = vunpack.c.l.b16 %v510
        %v547 = vunpack.c.l.b16 %v511
        %v548 = vunpack.c.l.b16 %v512
        %v549 = vunpack.c.l.b16 %v513
        %v550 = vunpack.c.l.b16 %v514
        %v551 = vunpack.c.l.b16 %v515
        %v552 = vpack.c.b16 %v537, %v536
        %v553 = vpack.c.b16 %v539, %v538
        %v554 = vpack.c.b16 %v541, %v540
        %v555 = vpack.c.b16 %v543, %v542
        %v556 = vpack.c.b16 %v545, %v544
        %v557 = vpack.c.b16 %v547, %v546
        %v558 = vpack.c.b16 %v549, %v548
        %v559 = vpack.c.b16 %v551, %v550
        %568 = vmatpush.bf16.msra.mxu0 %v559
        %569 = vmatpush.bf16.msra.mxu0 %v558
        %570 = vmatpush.bf16.msra.mxu0 %v557
        %571 = vmatpush.bf16.msra.mxu0 %v556
        %572 = vmatpush.bf16.msra.mxu0 %v555
        %573 = vmatpush.bf16.msra.mxu0 %v554
        %574 = vmatpush.bf16.msra.mxu0 %v553
        %575 = vmatpush.bf16.msra.mxu0 %v552
        %576 = vmatmul.bf16.gmra.mxu0 %v499
        %v577 = vpop.f32.mrf.mxu0
        %v578 = vadd.f32 %v518, %v577
        %v579 = vpop.f32.mrf.mxu0
        %580 = vdwg.mxu0
        %v581 = vmax.f32 %v578, 0.0
        %v582 = vpack.c.bf16 %v581, %v581
        %v583 = vld [vmem:[#allocation8] sm:$0xf]
        %v584 = vld [vmem:[#allocation8 + $0x4] sm:$0xf]
        %v585 = vld [vmem:[#allocation8 + $0x8] sm:$0xf]
        %v586 = vld [vmem:[#allocation8 + $0xc] sm:$0xf]
        %v587 = vld [vmem:[#allocation8 + $0x10] sm:$0xf]
        %v588 = vld [vmem:[#allocation8 + $0x14] sm:$0xf]
        %v589 = vld [vmem:[#allocation8 + $0x18] sm:$0xf]
        %v590 = vld [vmem:[#allocation8 + $0x1c] sm:$0xf]
        %v591 = vld [vmem:[#allocation8 + $0x20] sm:$0xf]
        %v592 = vld [vmem:[#allocation8 + $0x24] sm:$0xf]
        %v593 = vld [vmem:[#allocation8 + $0x28] sm:$0xf]
        %v594 = vld [vmem:[#allocation8 + $0x2c] sm:$0xf]
        %v595 = vld [vmem:[#allocation8 + $0x30] sm:$0xf]
        %v596 = vld [vmem:[#allocation8 + $0x34] sm:$0xf]
        %v597 = vld [vmem:[#allocation8 + $0x38] sm:$0xf]
        %v598 = vld [vmem:[#allocation8 + $0x3c] sm:$0xf]
        %v599 = vld [vmem:[%s6] sm:$0x1]
        %v601 = vperm.slane %v599, 0
        %v619 = vunpack.c.l.b16 %v583
        %v620 = vunpack.c.l.b16 %v584
        %v621 = vunpack.c.l.b16 %v585
        %v622 = vunpack.c.l.b16 %v586
        %v623 = vunpack.c.l.b16 %v587
        %v624 = vunpack.c.l.b16 %v588
        %v625 = vunpack.c.l.b16 %v589
        %v626 = vunpack.c.l.b16 %v590
        %v627 = vunpack.c.l.b16 %v591
        %v628 = vunpack.c.l.b16 %v592
        %v629 = vunpack.c.l.b16 %v593
        %v630 = vunpack.c.l.b16 %v594
        %v631 = vunpack.c.l.b16 %v595
        %v632 = vunpack.c.l.b16 %v596
        %v633 = vunpack.c.l.b16 %v597
        %v634 = vunpack.c.l.b16 %v598
        %v635 = vpack.c.b16 %v620, %v619
        %v636 = vpack.c.b16 %v622, %v621
        %v637 = vpack.c.b16 %v624, %v623
        %v638 = vpack.c.b16 %v626, %v625
        %v639 = vpack.c.b16 %v628, %v627
        %v640 = vpack.c.b16 %v630, %v629
        %v641 = vpack.c.b16 %v632, %v631
        %v642 = vpack.c.b16 %v634, %v633
        %651 = vmatpush.bf16.msra.mxu0 %v642
        %652 = vmatpush.bf16.msra.mxu0 %v641
        %653 = vmatpush.bf16.msra.mxu0 %v640
        %654 = vmatpush.bf16.msra.mxu0 %v639
        %655 = vmatpush.bf16.msra.mxu0 %v638
        %656 = vmatpush.bf16.msra.mxu0 %v637
        %657 = vmatpush.bf16.msra.mxu0 %v636
        %658 = vmatpush.bf16.msra.mxu0 %v635
        %659 = vmatmul.bf16.gmra.mxu0 %v582
        %v660 = vpop.f32.mrf.mxu0
        %v661 = vadd.f32 %v601, %v660
        %v662 = vpop.f32.mrf.mxu0
        %663 = vdwg.mxu0
        %v664 = vmax.f32 %v661, 0.0
        %v665 = vpack.c.bf16 %v664, %v664
        %v666 = vld [vmem:[#allocation10] sm:$0xf]
        %v667 = vld [vmem:[#allocation10 + $0x4] sm:$0xf]
        %v668 = vld [vmem:[#allocation10 + $0x8] sm:$0xf]
        %v669 = vld [vmem:[#allocation10 + $0xc] sm:$0xf]
        %v670 = vld [vmem:[#allocation10 + $0x10] sm:$0xf]
        %v671 = vld [vmem:[#allocation10 + $0x14] sm:$0xf]
        %v672 = vld [vmem:[#allocation10 + $0x18] sm:$0xf]
        %v673 = vld [vmem:[#allocation10 + $0x1c] sm:$0xf]
        %v674 = vld [vmem:[#allocation10 + $0x20] sm:$0xf]
        %v675 = vld [vmem:[#allocation10 + $0x24] sm:$0xf]
        %v676 = vld [vmem:[#allocation10 + $0x28] sm:$0xf]
        %v677 = vld [vmem:[#allocation10 + $0x2c] sm:$0xf]
        %v678 = vld [vmem:[#allocation10 + $0x30] sm:$0xf]
        %v679 = vld [vmem:[#allocation10 + $0x34] sm:$0xf]
        %v680 = vld [vmem:[#allocation10 + $0x38] sm:$0xf]
        %v681 = vld [vmem:[#allocation10 + $0x3c] sm:$0xf]
        %v682 = vld [vmem:[%s8] sm:$0x1]
        %v684 = vperm.slane %v682, 0
        %v702 = vunpack.c.l.b16 %v666
        %v703 = vunpack.c.l.b16 %v667
        %v704 = vunpack.c.l.b16 %v668
        %v705 = vunpack.c.l.b16 %v669
        %v706 = vunpack.c.l.b16 %v670
        %v707 = vunpack.c.l.b16 %v671
        %v708 = vunpack.c.l.b16 %v672
        %v709 = vunpack.c.l.b16 %v673
        %v710 = vunpack.c.l.b16 %v674
        %v711 = vunpack.c.l.b16 %v675
        %v712 = vunpack.c.l.b16 %v676
        %v713 = vunpack.c.l.b16 %v677
        %v714 = vunpack.c.l.b16 %v678
        %v715 = vunpack.c.l.b16 %v679
        %v716 = vunpack.c.l.b16 %v680
        %v717 = vunpack.c.l.b16 %v681
        %v718 = vpack.c.b16 %v703, %v702
        %v719 = vpack.c.b16 %v705, %v704
        %v720 = vpack.c.b16 %v707, %v706
        %v721 = vpack.c.b16 %v709, %v708
        %v722 = vpack.c.b16 %v711, %v710
        %v723 = vpack.c.b16 %v713, %v712
        %v724 = vpack.c.b16 %v715, %v714
        %v725 = vpack.c.b16 %v717, %v716
        %734 = vmatpush.bf16.msra.mxu0 %v725
        %735 = vmatpush.bf16.msra.mxu0 %v724
        %736 = vmatpush.bf16.msra.mxu0 %v723
        %737 = vmatpush.bf16.msra.mxu0 %v722
        %738 = vmatpush.bf16.msra.mxu0 %v721
        %739 = vmatpush.bf16.msra.mxu0 %v720
        %740 = vmatpush.bf16.msra.mxu0 %v719
        %741 = vmatpush.bf16.msra.mxu0 %v718
        %742 = vmatmul.bf16.gmra.mxu0 %v665
        %v743 = vpop.f32.mrf.mxu0
        %v744 = vadd.f32 %v684, %v743
        %v745 = vpop.f32.mrf.mxu0
        %746 = vdwg.mxu0
        %747 = vst [vmem:[%s415] sm:$0xff] %v744
        %s748 = sand.u32 %s230, 1
        %s749 = scalar_lea.sflag [#allocation4], %s748
        %s750 = sand.u32 %s230, 1
        %s751 = smul.addr %s750, 8
        %s752 = scalar_lea.vmem [#allocation11], %s751
        // Predicated region
        $region77: #{tpu_custom_call.1} parent=55 // pred_check
          %p753 = pneg %p240
        $region78: #{tpu_custom_call.1} parent=55 // pred_check_branch
          %755 = sbr.rel (%p753) target = $region80
        $region79: #{tpu_custom_call.1} parent=55 // pred_region
          %757 = vsyncadd %s749, 0
          %s758 = smul.addr %s28, 8
          %s759 = scalar_lea.hbm %s9, %s758
          %s761 = sshll.u32 %s752, 4
          %s762 = int_to_ptr.vmem [resolvable:$true] %s761
          %s763 = sshll.u32 %s759, 4
          %s764 = int_to_ptr.hbm [resolvable:$true] %s763
          %766 = dma.vmem_to_hbm [thread:$0]  %s762, 128, %s764, %s749
        $region80: #{tpu_custom_call.1} parent=55 // pred_fallthru
          _
      $region56: #{tpu_custom_call.1} parent=5 // pred_fallthru
        _
      %p767 = scmp.le.s32.totalorder 2, %s23
      // Predicated region
      $region81: #{tpu_custom_call.1} parent=5 // pred_check
        %p768 = pneg %p767
      $region82: #{tpu_custom_call.1} parent=5 // pred_check_branch
        %770 = sbr.rel (%p768) target = $region84
      $region83: #{tpu_custom_call.1} parent=5 // pred_region
        %s771 = ssub.s32 %s23, 2
        // Predicated region
        $region85: #{tpu_custom_call.1} parent=83 // pred_check
          %p772 = pneg %p246
        $region86: #{tpu_custom_call.1} parent=83 // pred_check_branch
          %774 = sbr.rel (%p772) target = $region88
        $region87: #{tpu_custom_call.1} parent=83 // pred_region
          %s775 = sand.u32 %s231, 1
          %s776 = scalar_lea.sflag [#allocation4], %s775
          %s777 = sand.u32 %s231, 1
          %s778 = smul.addr %s777, 8
          %s779 = scalar_lea.vmem [#allocation11], %s778
          %781 = dma.done %s776, 128
        $region88: #{tpu_custom_call.1} parent=83 // pred_fallthru
          _
      $region84: #{tpu_custom_call.1} parent=5 // pred_fallthru
        _
    $region6: #{tpu_custom_call.1} parent=1 // loop_footer
      %s27 = sadd.s32 1, %s23
    $region7: #{tpu_custom_call.1} parent=1 // loop_footer_branch
      %22 = sbr.rel target = $region3
    $region8: #{tpu_custom_call.1} parent=1 // loop_exit
      _
    %782 = vsyncpa [#allocation3], 1
    %s783 = scalar_lea.sflag [#allocation3], 1
    %784 = vsyncpa %s783, 1
    %785 = vsyncpa [#allocation6], 1
    %786 = vsyncpa [#allocation9], 1
    %787 = vsyncpa [#allocation4], 1
    %s788 = scalar_lea.sflag [#allocation4], 1
    %789 = vsyncpa %s788, 1

// kernel: tpu_custom_call.1
$region0: #{tpu_custom_call.1}
  #allocation0 [shape = 'u32[]', space=smem, size = 0x4, offset = 0x4, fixed_abs, tag = 'smem constant byte address 0x4 - core index']
  #allocation1 [shape = 'u32[72,128]{1,0:T(1,128)}', space=vmem, size = 0x9000, scoped, tag = 'internal scratch']
  %s0 = inlined_call_operand.hbm [shape: bf16[16,128], index: 0, kind: input, shape index: {}]
  %s1 = inlined_call_operand.hbm [shape: bf16[128,128], index: 1, kind: input, shape index: {}]
  %s2 = inlined_call_operand.vmem [shape: f32[1,128], index: 2, kind: input, shape index: {}]
  %s3 = inlined_call_operand.hbm [shape: bf16[128,128], index: 3, kind: input, shape index: {}]
  %s4 = inlined_call_operand.vmem [shape: f32[1,128], index: 4, kind: input, shape index: {}]
  %s5 = inlined_call_operand.hbm [shape: bf16[128,128], index: 5, kind: input, shape index: {}]
  %s6 = inlined_call_operand.vmem [shape: f32[1,128], index: 6, kind: input, shape index: {}]
  %s7 = inlined_call_operand.hbm [shape: bf16[128,128], index: 7, kind: input, shape index: {}]
  %s8 = inlined_call_operand.vmem [shape: f32[1,128], index: 8, kind: input, shape index: {}]
  %s9 = inlined_call_operand.hbm [shape: f32[16,128], index: 9, kind: output, shape index: {}]
  %s10 = sld [smem:[#allocation0]]
  $region89: #{tpu_custom_call.1} parent=0
    _
  %s12 = ssub.s32 1, %s10
  %s13 = scalar_select 0, %s12, %s10
  $region1: #{tpu_custom_call.1} parent=0
    #allocation2 [shape = 'u8[4096]{0}', space=vmem, size = 0x1000, scoped, tag = 'input window, operand 0']
    #allocation3 [shape = 's32[2]{0}', space=sflag, size = 0x8, scoped, tag = 'scoped memory for tpu_custom_call.1']
    #allocation4 [shape = 's32[2]{0}', space=sflag, size = 0x8, scoped, tag = 'scoped memory for tpu_custom_call.1']
    #allocation5 [shape = 'u8[32768]{0}', space=vmem, size = 0x8000, scoped, tag = 'input window, operand 1, single buffered']
    #allocation6 [shape = 's32[1]{0}', space=sflag, size = 0x4, scoped, tag = 'scoped memory for tpu_custom_call.1']
    #allocation7 [shape = 'u8[32768]{0}', space=vmem, size = 0x8000, scoped, tag = 'input window, operand 3, single buffered']
    #allocation8 [shape = 'u8[32768]{0}', space=vmem, size = 0x8000, scoped, tag = 'input window, operand 5, single buffered']
    #allocation9 [shape = 's32[1]{0}', space=sflag, size = 0x4, scoped, tag = 'scoped memory for tpu_custom_call.1']
    #allocation10 [shape = 'u8[32768]{0}', space=vmem, size = 0x8000, scoped, tag = 'input window, operand 7, single buffered']
    #allocation11 [shape = 'u8[8192]{0}', space=vmem, size = 0x2000, scoped, tag = 'output window, operand 0']
    %14 = vsyncpa [#allocation3], 0
    %s15 = scalar_lea.sflag [#allocation3], 1
    %16 = vsyncpa %s15, 0
    %17 = vsyncpa [#allocation6], 0
    %18 = vsyncpa [#allocation9], 0
    %19 = vsyncpa [#allocation4], 0
    %s20 = scalar_lea.sflag [#allocation4], 1
    %21 = vsyncpa %s20, 0
    loop: start=0, step=1, limit=4
    $region2: #{tpu_custom_call.1} parent=1 // loop_pre_header
      _
    $region3: #{tpu_custom_call.1} parent=1 // loop_header
      %s23 = sphi 0, %s27
      %p24 = scmp.ge.s32.totalorder %s23, 4
      %s33 = sphi 0, %s35
      %s36 = sphi 0, %s33
      %s37 = sphi 0, %s36
      %s53 = sphi 0, %s37
      %s57 = sphi 0, %s57
      %s59 = sphi 0, %s57
      %s60 = sphi 0, %s59
      %s74 = sphi 0, %s60
      %s78 = sphi 0, %s78
      %s80 = sphi 0, %s78
      %s81 = sphi 0, %s80
      %s95 = sphi 0, %s81
      %s99 = sphi 0, %s99
      %s101 = sphi 0, %s99
      %s102 = sphi 0, %s101
      %s116 = sphi 0, %s102
      %s120 = sphi 0, %s120
      %s122 = sphi 0, %s120
      %s123 = sphi 0, %s122
      %s137 = sphi 0, %s123
      %s141 = sphi 0, %s141
      %s143 = sphi 0, %s141
      %s144 = sphi 0, %s143
      %s158 = sphi 0, %s144
      %s162 = sphi 0, %s162
      %s164 = sphi 0, %s162
      %s165 = sphi 0, %s164
      %s179 = sphi 0, %s165
      %s183 = sphi 0, %s183
      %s185 = sphi 0, %s183
      %s186 = sphi 0, %s185
      %s200 = sphi 0, %s186
      %s204 = sphi 0, %s204
      %s206 = sphi 0, %s204
      %s207 = sphi 0, %s206
      %s221 = sphi 0, %s207
      %s227 = sphi 0, %s229
      %s230 = sphi 0, %s227
      %s231 = sphi 0, %s230
      %s247 = sphi 0, %s231
    $region4: #{tpu_custom_call.1} parent=1 // loop_header_branch
      %26 = sbr.rel (%p24) target = $region8
    $region5: #{tpu_custom_call.1} parent=1 // loop_body
      %s28 = ssub.s32 %s23, 1
      %s29 = ssub.s32 %s23, 2
      %s30 = sadd.s32 %s23, 1
      %s31 = ssub.s32 %s23, %s30
      %p32 = scmp.eq.s32.totalorder %s31, 0
      %s34 = sadd.s32 %s33, 1
      %s35 = scalar_select %p32, %s33, %s34
      %p38 = pneg %p32
      %p39 = scmp.eq.s32.totalorder %s23, 1
      %p40 = por %p38, %p39
      %p41 = scmp.ne.s32.totalorder %s33, %s36
      %p42 = scmp.eq.s32.totalorder %s23, 0
      %p43 = por %p41, %p42
      %p44 = scmp.ne.s32.totalorder %s33, %s36
      %p45 = scmp.eq.s32.totalorder %s28, 1
      %p46 = por %p44, %p45
      %p47 = scmp.ne.s32.totalorder %s36, %s37
      %p48 = scmp.eq.s32.totalorder %s28, 0
      %p49 = por %p47, %p48
      %p50 = scmp.ne.s32.totalorder %s36, %s37
      %p51 = scmp.eq.s32.totalorder %s29, 1
      %p52 = por %p50, %p51
      %p54 = scmp.ne.s32.totalorder %s37, %s53
      %p55 = scmp.eq.s32.totalorder %s29, 0
      %p56 = por %p54, %p55
      %s58 = sadd.s32 %s57, 1
      %p61 = scmp.eq.s32.totalorder %s23, 1
      %p62 = scmp.ne.s32.totalorder %s57, %s59
      %p63 = scmp.eq.s32.totalorder %s23, 0
      %p64 = por %p62, %p63
      %p65 = scmp.ne.s32.totalorder %s57, %s59
      %p66 = scmp.eq.s32.totalorder %s28, 1
      %p67 = por %p65, %p66
      %p68 = scmp.ne.s32.totalorder %s59, %s60
      %p69 = scmp.eq.s32.totalorder %s28, 0
      %p70 = por %p68, %p69
      %p71 = scmp.ne.s32.totalorder %s59, %s60
      %p72 = scmp.eq.s32.totalorder %s29, 1
      %p73 = por %p71, %p72
      %p75 = scmp.ne.s32.totalorder %s60, %s74
      %p76 = scmp.eq.s32.totalorder %s29, 0
      %p77 = por %p75, %p76
      %s79 = sadd.s32 %s78, 1
      %p82 = scmp.eq.s32.totalorder %s23, 1
      %p83 = scmp.ne.s32.totalorder %s78, %s80
      %p84 = scmp.eq.s32.totalorder %s23, 0
      %p85 = por %p83, %p84
      %p86 = scmp.ne.s32.totalorder %s78, %s80
      %p87 = scmp.eq.s32.totalorder %s28, 1
      %p88 = por %p86, %p87
      %p89 = scmp.ne.s32.totalorder %s80, %s81
      %p90 = scmp.eq.s32.totalorder %s28, 0
      %p91 = por %p89, %p90
      %p92 = scmp.ne.s32.totalorder %s80, %s81
      %p93 = scmp.eq.s32.totalorder %s29, 1
      %p94 = por %p92, %p93
      %p96 = scmp.ne.s32.totalorder %s81, %s95
      %p97 = scmp.eq.s32.totalorder %s29, 0
      %p98 = por %p96, %p97
      %s100 = sadd.s32 %s99, 1
      %p103 = scmp.eq.s32.totalorder %s23, 1
      %p104 = scmp.ne.s32.totalorder %s99, %s101
      %p105 = scmp.eq.s32.totalorder %s23, 0
      %p106 = por %p104, %p105
      %p107 = scmp.ne.s32.totalorder %s99, %s101
      %p108 = scmp.eq.s32.totalorder %s28, 1
      %p109 = por %p107, %p108
      %p110 = scmp.ne.s32.totalorder %s101, %s102
      %p111 = scmp.eq.s32.totalorder %s28, 0
      %p112 = por %p110, %p111
      %p113 = scmp.ne.s32.totalorder %s101, %s102
      %p114 = scmp.eq.s32.totalorder %s29, 1
      %p115 = por %p113, %p114
      %p117 = scmp.ne.s32.totalorder %s102, %s116
      %p118 = scmp.eq.s32.totalorder %s29, 0
      %p119 = por %p117, %p118
      %s121 = sadd.s32 %s120, 1
      %p124 = scmp.eq.s32.totalorder %s23, 1
      %p125 = scmp.ne.s32.totalorder %s120, %s122
      %p126 = scmp.eq.s32.totalorder %s23, 0
      %p127 = por %p125, %p126
      %p128 = scmp.ne.s32.totalorder %s120, %s122
      %p129 = scmp.eq.s32.totalorder %s28, 1
      %p130 = por %p128, %p129
      %p131 = scmp.ne.s32.totalorder %s122, %s123
      %p132 = scmp.eq.s32.totalorder %s28, 0
      %p133 = por %p131, %p132
      %p134 = scmp.ne.s32.totalorder %s122, %s123
      %p135 = scmp.eq.s32.totalorder %s29, 1
      %p136 = por %p134, %p135
      %p138 = scmp.ne.s32.totalorder %s123, %s137
      %p139 = scmp.eq.s32.totalorder %s29, 0
      %p140 = por %p138, %p139
      %s142 = sadd.s32 %s141, 1
      %p145 = scmp.eq.s32.totalorder %s23, 1
      %p146 = scmp.ne.s32.totalorder %s141, %s143
      %p147 = scmp.eq.s32.totalorder %s23, 0
      %p148 = por %p146, %p147
      %p149 = scmp.ne.s32.totalorder %s141, %s143
      %p150 = scmp.eq.s32.totalorder %s28, 1
      %p151 = por %p149, %p150
      %p152 = scmp.ne.s32.totalorder %s143, %s144
      %p153 = scmp.eq.s32.totalorder %s28, 0
      %p154 = por %p152, %p153
      %p155 = scmp.ne.s32.totalorder %s143, %s144
      %p156 = scmp.eq.s32.totalorder %s29, 1
      %p157 = por %p155, %p156
      %p159 = scmp.ne.s32.totalorder %s144, %s158
      %p160 = scmp.eq.s32.totalorder %s29, 0
      %p161 = por %p159, %p160
      %s163 = sadd.s32 %s162, 1
      %p166 = scmp.eq.s32.totalorder %s23, 1
      %p167 = scmp.ne.s32.totalorder %s162, %s164
      %p168 = scmp.eq.s32.totalorder %s23, 0
      %p169 = por %p167, %p168
      %p170 = scmp.ne.s32.totalorder %s162, %s164
      %p171 = scmp.eq.s32.totalorder %s28, 1
      %p172 = por %p170, %p171
      %p173 = scmp.ne.s32.totalorder %s164, %s165
      %p174 = scmp.eq.s32.totalorder %s28, 0
      %p175 = por %p173, %p174
      %p176 = scmp.ne.s32.totalorder %s164, %s165
      %p177 = scmp.eq.s32.totalorder %s29, 1
      %p178 = por %p176, %p177
      %p180 = scmp.ne.s32.totalorder %s165, %s179
      %p181 = scmp.eq.s32.totalorder %s29, 0
      %p182 = por %p180, %p181
      %s184 = sadd.s32 %s183, 1
      %p187 = scmp.eq.s32.totalorder %s23, 1
      %p188 = scmp.ne.s32.totalorder %s183, %s185
      %p189 = scmp.eq.s32.totalorder %s23, 0
      %p190 = por %p188, %p189
      %p191 = scmp.ne.s32.totalorder %s183, %s185
      %p192 = scmp.eq.s32.totalorder %s28, 1
      %p193 = por %p191, %p192
      %p194 = scmp.ne.s32.totalorder %s185, %s186
      %p195 = scmp.eq.s32.totalorder %s28, 0
      %p196 = por %p194, %p195
      %p197 = scmp.ne.s32.totalorder %s185, %s186
      %p198 = scmp.eq.s32.totalorder %s29, 1
      %p199 = por %p197, %p198
      %p201 = scmp.ne.s32.totalorder %s186, %s200
      %p202 = scmp.eq.s32.totalorder %s29, 0
      %p203 = por %p201, %p202
      %s205 = sadd.s32 %s204, 1
      %p208 = scmp.eq.s32.totalorder %s23, 1
      %p209 = scmp.ne.s32.totalorder %s204, %s206
      %p210 = scmp.eq.s32.totalorder %s23, 0
      %p211 = por %p209, %p210
      %p212 = scmp.ne.s32.totalorder %s204, %s206
      %p213 = scmp.eq.s32.totalorder %s28, 1
      %p214 = por %p212, %p213
      %p215 = scmp.ne.s32.totalorder %s206, %s207
      %p216 = scmp.eq.s32.totalorder %s28, 0
      %p217 = por %p215, %p216
      %p218 = scmp.ne.s32.totalorder %s206, %s207
      %p219 = scmp.eq.s32.totalorder %s29, 1
      %p220 = por %p218, %p219
      %p222 = scmp.ne.s32.totalorder %s207, %s221
      %p223 = scmp.eq.s32.totalorder %s29, 0
      %p224 = por %p222, %p223
      %s225 = ssub.s32 %s23, %s30
      %p226 = scmp.eq.s32.totalorder %s225, 0
      %s228 = sadd.s32 %s227, 1
      %s229 = scalar_select %p226, %s227, %s228
      %p232 = pneg %p226
      %p233 = scmp.eq.s32.totalorder %s23, 1
      %p234 = por %p232, %p233
      %p235 = scmp.ne.s32.totalorder %s227, %s230
      %p236 = scmp.eq.s32.totalorder %s23, 0
      %p237 = por %p235, %p236
      %p238 = scmp.ne.s32.totalorder %s227, %s230
      %p239 = scmp.eq.s32.totalorder %s28, 1
      %p240 = por %p238, %p239
      %p241 = scmp.ne.s32.totalorder %s230, %s231
      %p242 = scmp.eq.s32.totalorder %s28, 0
      %p243 = por %p241, %p242
      %p244 = scmp.ne.s32.totalorder %s230, %s231
      %p245 = scmp.eq.s32.totalorder %s29, 1
      %p246 = por %p244, %p245
      %p248 = scmp.ne.s32.totalorder %s231, %s247
      %p249 = scmp.eq.s32.totalorder %s29, 0
      %p250 = por %p248, %p249
      %p251 = scmp.le.s32.totalorder 1, %s23
      %p252 = scmp.lt.s32.totalorder %s23, 3
      %p253 = pnand %p251, %p252
      %p254 = pneg %p253
      // Predicated region
      $region9: #{tpu_custom_call.1} parent=5 // pred_check
        _
      $region10: #{tpu_custom_call.1} parent=5 // pred_check_branch
        %256 = sbr.rel (%p253) target = $region12
      $region11: #{tpu_custom_call.1} parent=5 // pred_region
        %s257 = ssub.s32 %s23, 1
        // Predicated region
        $region13: #{tpu_custom_call.1} parent=11 // pred_check
          %p258 = pneg %p70
        $region14: #{tpu_custom_call.1} parent=11 // pred_check_branch
          %260 = sbr.rel (%p258) target = $region16
        $region15: #{tpu_custom_call.1} parent=11 // pred_region
          %262 = vsyncadd [#allocation6], 0
          %s263 = sshll.u32 %s1, 4
          %s264 = int_to_ptr.hbm [resolvable:$true] %s263
          %s265 = sshll.u32 [#allocation5], 4
          %s266 = int_to_ptr.vmem [resolvable:$true] %s265
          %271 = dma.hbm_to_vmem [thread:$0]  %s264, 1024, %s266, [#allocation6], 64, 64, 4
        $region16: #{tpu_custom_call.1} parent=11 // pred_fallthru
          _
        // Predicated region
        $region17: #{tpu_custom_call.1} parent=11 // pred_check
          %p272 = pneg %p91
        $region18: #{tpu_custom_call.1} parent=11 // pred_check_branch
          %274 = sbr.rel (%p272) target = $region20
        $region19: #{tpu_custom_call.1} parent=11 // pred_region
          _
        $region20: #{tpu_custom_call.1} parent=11 // pred_fallthru
          _
        // Predicated region
        $region21: #{tpu_custom_call.1} parent=11 // pred_check
          %p275 = pneg %p112
        $region22: #{tpu_custom_call.1} parent=11 // pred_check_branch
          %277 = sbr.rel (%p275) target = $region24
        $region23: #{tpu_custom_call.1} parent=11 // pred_region
          %279 = vsyncadd [#allocation6], 0
          %s280 = sshll.u32 %s3, 4
          %s281 = int_to_ptr.hbm [resolvable:$true] %s280
          %s282 = sshll.u32 [#allocation7], 4
          %s283 = int_to_ptr.vmem [resolvable:$true] %s282
          %288 = dma.hbm_to_vmem [thread:$0]  %s281, 1024, %s283, [#allocation6], 64, 64, 4
        $region24: #{tpu_custom_call.1} parent=11 // pred_fallthru
          _
        // Predicated region
        $region25: #{tpu_custom_call.1} parent=11 // pred_check
          %p289 = pneg %p133
        $region26: #{tpu_custom_call.1} parent=11 // pred_check_branch
          %291 = sbr.rel (%p289) target = $region28
        $region27: #{tpu_custom_call.1} parent=11 // pred_region
          _
        $region28: #{tpu_custom_call.1} parent=11 // pred_fallthru
          _
        // Predicated region
        $region29: #{tpu_custom_call.1} parent=11 // pred_check
          %p292 = pneg %p154
        $region30: #{tpu_custom_call.1} parent=11 // pred_check_branch
          %294 = sbr.rel (%p292) target = $region32
        $region31: #{tpu_custom_call.1} parent=11 // pred_region
          %296 = vsyncadd [#allocation9], 0
          %s297 = sshll.u32 %s5, 4
          %s298 = int_to_ptr.hbm [resolvable:$true] %s297
          %s299 = sshll.u32 [#allocation8], 4
          %s300 = int_to_ptr.vmem [resolvable:$true] %s299
          %305 = dma.hbm_to_vmem [thread:$0]  %s298, 1024, %s300, [#allocation9], 64, 64, 4
        $region32: #{tpu_custom_call.1} parent=11 // pred_fallthru
          _
        // Predicated region
        $region33: #{tpu_custom_call.1} parent=11 // pred_check
          %p306 = pneg %p175
        $region34: #{tpu_custom_call.1} parent=11 // pred_check_branch
          %308 = sbr.rel (%p306) target = $region36
        $region35: #{tpu_custom_call.1} parent=11 // pred_region
          _
        $region36: #{tpu_custom_call.1} parent=11 // pred_fallthru
          _
        // Predicated region
        $region37: #{tpu_custom_call.1} parent=11 // pred_check
          %p309 = pneg %p196
        $region38: #{tpu_custom_call.1} parent=11 // pred_check_branch
          %311 = sbr.rel (%p309) target = $region40
        $region39: #{tpu_custom_call.1} parent=11 // pred_region
          %313 = vsyncadd [#allocation9], 0
          %s314 = sshll.u32 %s7, 4
          %s315 = int_to_ptr.hbm [resolvable:$true] %s314
          %s316 = sshll.u32 [#allocation10], 4
          %s317 = int_to_ptr.vmem [resolvable:$true] %s316
          %322 = dma.hbm_to_vmem [thread:$0]  %s315, 1024, %s317, [#allocation9], 64, 64, 4
        $region40: #{tpu_custom_call.1} parent=11 // pred_fallthru
          _
        // Predicated region
        $region41: #{tpu_custom_call.1} parent=11 // pred_check
          %p323 = pneg %p217
        $region42: #{tpu_custom_call.1} parent=11 // pred_check_branch
          %325 = sbr.rel (%p323) target = $region44
        $region43: #{tpu_custom_call.1} parent=11 // pred_region
          _
        $region44: #{tpu_custom_call.1} parent=11 // pred_fallthru
          _
      $region12: #{tpu_custom_call.1} parent=5 // pred_fallthru
        _
      %p326 = scmp.lt.s32.totalorder %s23, 2
      // Predicated region
      $region45: #{tpu_custom_call.1} parent=5 // pred_check
        %p327 = pneg %p326
      $region46: #{tpu_custom_call.1} parent=5 // pred_check_branch
        %329 = sbr.rel (%p327) target = $region48
      $region47: #{tpu_custom_call.1} parent=5 // pred_region
        // Predicated region
        $region49: #{tpu_custom_call.1} parent=47 // pred_check
          %p330 = pneg %p43
        $region50: #{tpu_custom_call.1} parent=47 // pred_check_branch
          %332 = sbr.rel (%p330) target = $region52
        $region51: #{tpu_custom_call.1} parent=47 // pred_region
          %s333 = sand.u32 %s33, 1
          %s334 = scalar_lea.sflag [#allocation3], %s333
          %s335 = sand.u32 %s33, 1
          %s336 = smul.addr %s335, 4
          %s337 = scalar_lea.vmem [#allocation2], %s336
          %339 = vsyncadd %s334, 0
          %s340 = smul.addr %s23, 4
          %s341 = scalar_lea.hbm %s0, %s340
          %s343 = sshll.u32 %s341, 4
          %s344 = int_to_ptr.hbm [resolvable:$true] %s343
          %s345 = sshll.u32 %s337, 4
          %s346 = int_to_ptr.vmem [resolvable:$true] %s345
          %348 = dma.hbm_to_vmem [thread:$0]  %s344, 64, %s346, %s334
        $region52: #{tpu_custom_call.1} parent=47 // pred_fallthru
          _
      $region48: #{tpu_custom_call.1} parent=5 // pred_fallthru
        _
      %p349 = scmp.le.s32.totalorder 1, %s23
      %p350 = scmp.lt.s32.totalorder %s23, 3
      %p351 = pnand %p349, %p350
      %p352 = pneg %p351
      // Predicated region
      $region53: #{tpu_custom_call.1} parent=5 // pred_check
        _
      $region54: #{tpu_custom_call.1} parent=5 // pred_check_branch
        %354 = sbr.rel (%p351) target = $region56
      $region55: #{tpu_custom_call.1} parent=5 // pred_region
        %s355 = ssub.s32 %s23, 1
        %s356 = sand.u32 %s36, 1
        %s357 = scalar_lea.sflag [#allocation3], %s356
        %s358 = sand.u32 %s36, 1
        %s359 = smul.addr %s358, 4
        %s360 = scalar_lea.vmem [#allocation2], %s359
        // Predicated region
        $region57: #{tpu_custom_call.1} parent=55 // pred_check
          %p361 = pneg %p49
        $region58: #{tpu_custom_call.1} parent=55 // pred_check_branch
          %363 = sbr.rel (%p361) target = $region60
        $region59: #{tpu_custom_call.1} parent=55 // pred_region
          %365 = dma.done %s357, 64
        $region60: #{tpu_custom_call.1} parent=55 // pred_fallthru
          _
        // Predicated region
        $region61: #{tpu_custom_call.1} parent=55 // pred_check
          %p366 = pneg %p70
        $region62: #{tpu_custom_call.1} parent=55 // pred_check_branch
          %368 = sbr.rel (%p366) target = $region64
        $region63: #{tpu_custom_call.1} parent=55 // pred_region
          %370 = dma.done [#allocation6], 1024
        $region64: #{tpu_custom_call.1} parent=55 // pred_fallthru
          _
        // Predicated region
        $region65: #{tpu_custom_call.1} parent=55 // pred_check
          %p371 = pneg %p112
        $region66: #{tpu_custom_call.1} parent=55 // pred_check_branch
          %373 = sbr.rel (%p371) target = $region68
        $region67: #{tpu_custom_call.1} parent=55 // pred_region
          %375 = dma.done [#allocation6], 1024
        $region68: #{tpu_custom_call.1} parent=55 // pred_fallthru
          _
        // Predicated region
        $region69: #{tpu_custom_call.1} parent=55 // pred_check
          %p376 = pneg %p154
        $region70: #{tpu_custom_call.1} parent=55 // pred_check_branch
          %378 = sbr.rel (%p376) target = $region72
        $region71: #{tpu_custom_call.1} parent=55 // pred_region
          %380 = dma.done [#allocation9], 1024
        $region72: #{tpu_custom_call.1} parent=55 // pred_fallthru
          _
        // Predicated region
        $region73: #{tpu_custom_call.1} parent=55 // pred_check
          %p381 = pneg %p196
        $region74: #{tpu_custom_call.1} parent=55 // pred_check_branch
          %383 = sbr.rel (%p381) target = $region76
        $region75: #{tpu_custom_call.1} parent=55 // pred_region
          %385 = dma.done [#allocation9], 1024
        $region76: #{tpu_custom_call.1} parent=55 // pred_fallthru
          _
        %s386 = sand.u32 %s36, 1
        %s387 = scalar_lea.sflag [#allocation3], %s386
        %s388 = sand.u32 %s36, 1
        %s389 = smul.addr %s388, 4
        %s390 = scalar_lea.vmem [#allocation2], %s389
        %p391 = pneg %p49
        %p392 = pneg %p46
        %p393 = pneg %p70
        %p394 = pneg %p67
        %p395 = pneg %p91
        %p396 = pneg %p88
        %p397 = pneg %p112
        %p398 = pneg %p109
        %p399 = pneg %p133
        %p400 = pneg %p130
        %p401 = pneg %p154
        %p402 = pneg %p151
        %p403 = pneg %p175
        %p404 = pneg %p172
        %p405 = pneg %p196
        %p406 = pneg %p193
        %p407 = pneg %p217
        %p408 = pneg %p214
        %p409 = pneg %p243
        %p410 = pneg %p240
        %s411 = sand.u32 %s230, 1
        %s412 = scalar_lea.sflag [#allocation4], %s411
        %s413 = sand.u32 %s230, 1
        %s414 = smul.addr %s413, 8
        %s415 = scalar_lea.vmem [#allocation11], %s414
        %v416 = vld [vmem:[%s360] sm:$0xf]
        %v417 = vld [vmem:[#allocation5] sm:$0xf]
        %v418 = vld [vmem:[#allocation5 + $0x4] sm:$0xf]
        %v419 = vld [vmem:[#allocation5 + $0x8] sm:$0xf]
        %v420 = vld [vmem:[#allocation5 + $0xc] sm:$0xf]
        %v421 = vld [vmem:[#allocation5 + $0x10] sm:$0xf]
        %v422 = vld [vmem:[#allocation5 + $0x14] sm:$0xf]
        %v423 = vld [vmem:[#allocation5 + $0x18] sm:$0xf]
        %v424 = vld [vmem:[#allocation5 + $0x1c] sm:$0xf]
        %v425 = vld [vmem:[#allocation5 + $0x20] sm:$0xf]
        %v426 = vld [vmem:[#allocation5 + $0x24] sm:$0xf]
        %v427 = vld [vmem:[#allocation5 + $0x28] sm:$0xf]
        %v428 = vld [vmem:[#allocation5 + $0x2c] sm:$0xf]
        %v429 = vld [vmem:[#allocation5 + $0x30] sm:$0xf]
        %v430 = vld [vmem:[#allocation5 + $0x34] sm:$0xf]
        %v431 = vld [vmem:[#allocation5 + $0x38] sm:$0xf]
        %v432 = vld [vmem:[#allocation5 + $0x3c] sm:$0xf]
        %v433 = vld [vmem:[%s2] sm:$0x1]
        %v435 = vperm.slane %v433, 0
        %v453 = vunpack.c.l.b16 %v417
        %v454 = vunpack.c.l.b16 %v418
        %v455 = vunpack.c.l.b16 %v419
        %v456 = vunpack.c.l.b16 %v420
        %v457 = vunpack.c.l.b16 %v421
        %v458 = vunpack.c.l.b16 %v422
        %v459 = vunpack.c.l.b16 %v423
        %v460 = vunpack.c.l.b16 %v424
        %v461 = vunpack.c.l.b16 %v425
        %v462 = vunpack.c.l.b16 %v426
        %v463 = vunpack.c.l.b16 %v427
        %v464 = vunpack.c.l.b16 %v428
        %v465 = vunpack.c.l.b16 %v429
        %v466 = vunpack.c.l.b16 %v430
        %v467 = vunpack.c.l.b16 %v431
        %v468 = vunpack.c.l.b16 %v432
        %v469 = vpack.c.b16 %v454, %v453
        %v470 = vpack.c.b16 %v456, %v455
        %v471 = vpack.c.b16 %v458, %v457
        %v472 = vpack.c.b16 %v460, %v459
        %v473 = vpack.c.b16 %v462, %v461
        %v474 = vpack.c.b16 %v464, %v463
        %v475 = vpack.c.b16 %v466, %v465
        %v476 = vpack.c.b16 %v468, %v467
        %485 = vmatpush.bf16.msra.mxu0 %v476
        %486 = vmatpush.bf16.msra.mxu0 %v475
        %487 = vmatpush.bf16.msra.mxu0 %v474
        %488 = vmatpush.bf16.msra.mxu0 %v473
        %489 = vmatpush.bf16.msra.mxu0 %v472
        %490 = vmatpush.bf16.msra.mxu0 %v471
        %491 = vmatpush.bf16.msra.mxu0 %v470
        %492 = vmatpush.bf16.msra.mxu0 %v469
        %493 = vmatmul.bf16.gmra.mxu0 %v416
        %v494 = vpop.f32.mrf.mxu0
        %v495 = vadd.f32 %v435, %v494
        %v496 = vpop.f32.mrf.mxu0
        %497 = vdwg.mxu0
        %v498 = vmax.f32 %v495, 0.0
        %v499 = vpack.c.bf16 %v498, %v498
        %v500 = vld [vmem:[#allocation7] sm:$0xf]
        %v501 = vld [vmem:[#allocation7 + $0x4] sm:$0xf]
        %v502 = vld [vmem:[#allocation7 + $0x8] sm:$0xf]
        %v503 = vld [vmem:[#allocation7 + $0xc] sm:$0xf]
        %v504 = vld [vmem:[#allocation7 + $0x10] sm:$0xf]
        %v505 = vld [vmem:[#allocation7 + $0x14] sm:$0xf]
        %v506 = vld [vmem:[#allocation7 + $0x18] sm:$0xf]
        %v507 = vld [vmem:[#allocation7 + $0x1c] sm:$0xf]
        %v508 = vld [vmem:[#allocation7 + $0x20] sm:$0xf]
        %v509 = vld [vmem:[#allocation7 + $0x24] sm:$0xf]
        %v510 = vld [vmem:[#allocation7 + $0x28] sm:$0xf]
        %v511 = vld [vmem:[#allocation7 + $0x2c] sm:$0xf]
        %v512 = vld [vmem:[#allocation7 + $0x30] sm:$0xf]
        %v513 = vld [vmem:[#allocation7 + $0x34] sm:$0xf]
        %v514 = vld [vmem:[#allocation7 + $0x38] sm:$0xf]
        %v515 = vld [vmem:[#allocation7 + $0x3c] sm:$0xf]
        %v516 = vld [vmem:[%s4] sm:$0x1]
        %v518 = vperm.slane %v516, 0
        %v536 = vunpack.c.l.b16 %v500
        %v537 = vunpack.c.l.b16 %v501
        %v538 = vunpack.c.l.b16 %v502
        %v539 = vunpack.c.l.b16 %v503
        %v540 = vunpack.c.l.b16 %v504
        %v541 = vunpack.c.l.b16 %v505
        %v542 = vunpack.c.l.b16 %v506
        %v543 = vunpack.c.l.b16 %v507
        %v544 = vunpack.c.l.b16 %v508
        %v545 = vunpack.c.l.b16 %v509
        %v546 = vunpack.c.l.b16 %v510
        %v547 = vunpack.c.l.b16 %v511
        %v548 = vunpack.c.l.b16 %v512
        %v549 = vunpack.c.l.b16 %v513
        %v550 = vunpack.c.l.b16 %v514
        %v551 = vunpack.c.l.b16 %v515
        %v552 = vpack.c.b16 %v537, %v536
        %v553 = vpack.c.b16 %v539, %v538
        %v554 = vpack.c.b16 %v541, %v540
        %v555 = vpack.c.b16 %v543, %v542
        %v556 = vpack.c.b16 %v545, %v544
        %v557 = vpack.c.b16 %v547, %v546
        %v558 = vpack.c.b16 %v549, %v548
        %v559 = vpack.c.b16 %v551, %v550
        %568 = vmatpush.bf16.msra.mxu0 %v559
        %569 = vmatpush.bf16.msra.mxu0 %v558
        %570 = vmatpush.bf16.msra.mxu0 %v557
        %571 = vmatpush.bf16.msra.mxu0 %v556
        %572 = vmatpush.bf16.msra.mxu0 %v555
        %573 = vmatpush.bf16.msra.mxu0 %v554
        %574 = vmatpush.bf16.msra.mxu0 %v553
        %575 = vmatpush.bf16.msra.mxu0 %v552
        %576 = vmatmul.bf16.gmra.mxu0 %v499
        %v577 = vpop.f32.mrf.mxu0
        %v578 = vadd.f32 %v518, %v577
        %v579 = vpop.f32.mrf.mxu0
        %580 = vdwg.mxu0
        %v581 = vmax.f32 %v578, 0.0
        %v582 = vpack.c.bf16 %v581, %v581
        %v583 = vld [vmem:[#allocation8] sm:$0xf]
        %v584 = vld [vmem:[#allocation8 + $0x4] sm:$0xf]
        %v585 = vld [vmem:[#allocation8 + $0x8] sm:$0xf]
        %v586 = vld [vmem:[#allocation8 + $0xc] sm:$0xf]
        %v587 = vld [vmem:[#allocation8 + $0x10] sm:$0xf]
        %v588 = vld [vmem:[#allocation8 + $0x14] sm:$0xf]
        %v589 = vld [vmem:[#allocation8 + $0x18] sm:$0xf]
        %v590 = vld [vmem:[#allocation8 + $0x1c] sm:$0xf]
        %v591 = vld [vmem:[#allocation8 + $0x20] sm:$0xf]
        %v592 = vld [vmem:[#allocation8 + $0x24] sm:$0xf]
        %v593 = vld [vmem:[#allocation8 + $0x28] sm:$0xf]
        %v594 = vld [vmem:[#allocation8 + $0x2c] sm:$0xf]
        %v595 = vld [vmem:[#allocation8 + $0x30] sm:$0xf]
        %v596 = vld [vmem:[#allocation8 + $0x34] sm:$0xf]
        %v597 = vld [vmem:[#allocation8 + $0x38] sm:$0xf]
        %v598 = vld [vmem:[#allocation8 + $0x3c] sm:$0xf]
        %v599 = vld [vmem:[%s6] sm:$0x1]
        %v601 = vperm.slane %v599, 0
        %v619 = vunpack.c.l.b16 %v583
        %v620 = vunpack.c.l.b16 %v584
        %v621 = vunpack.c.l.b16 %v585
        %v622 = vunpack.c.l.b16 %v586
        %v623 = vunpack.c.l.b16 %v587
        %v624 = vunpack.c.l.b16 %v588
        %v625 = vunpack.c.l.b16 %v589
        %v626 = vunpack.c.l.b16 %v590
        %v627 = vunpack.c.l.b16 %v591
        %v628 = vunpack.c.l.b16 %v592
        %v629 = vunpack.c.l.b16 %v593
        %v630 = vunpack.c.l.b16 %v594
        %v631 = vunpack.c.l.b16 %v595
        %v632 = vunpack.c.l.b16 %v596
        %v633 = vunpack.c.l.b16 %v597
        %v634 = vunpack.c.l.b16 %v598
        %v635 = vpack.c.b16 %v620, %v619
        %v636 = vpack.c.b16 %v622, %v621
        %v637 = vpack.c.b16 %v624, %v623
        %v638 = vpack.c.b16 %v626, %v625
        %v639 = vpack.c.b16 %v628, %v627
        %v640 = vpack.c.b16 %v630, %v629
        %v641 = vpack.c.b16 %v632, %v631
        %v642 = vpack.c.b16 %v634, %v633
        %651 = vmatpush.bf16.msra.mxu0 %v642
        %652 = vmatpush.bf16.msra.mxu0 %v641
        %653 = vmatpush.bf16.msra.mxu0 %v640
        %654 = vmatpush.bf16.msra.mxu0 %v639
        %655 = vmatpush.bf16.msra.mxu0 %v638
        %656 = vmatpush.bf16.msra.mxu0 %v637
        %657 = vmatpush.bf16.msra.mxu0 %v636
        %658 = vmatpush.bf16.msra.mxu0 %v635
        %659 = vmatmul.bf16.gmra.mxu0 %v582
        %v660 = vpop.f32.mrf.mxu0
        %v661 = vadd.f32 %v601, %v660
        %v662 = vpop.f32.mrf.mxu0
        %663 = vdwg.mxu0
        %v664 = vmax.f32 %v661, 0.0
        %v665 = vpack.c.bf16 %v664, %v664
        %v666 = vld [vmem:[#allocation10] sm:$0xf]
        %v667 = vld [vmem:[#allocation10 + $0x4] sm:$0xf]
        %v668 = vld [vmem:[#allocation10 + $0x8] sm:$0xf]
        %v669 = vld [vmem:[#allocation10 + $0xc] sm:$0xf]
        %v670 = vld [vmem:[#allocation10 + $0x10] sm:$0xf]
        %v671 = vld [vmem:[#allocation10 + $0x14] sm:$0xf]
        %v672 = vld [vmem:[#allocation10 + $0x18] sm:$0xf]
        %v673 = vld [vmem:[#allocation10 + $0x1c] sm:$0xf]
        %v674 = vld [vmem:[#allocation10 + $0x20] sm:$0xf]
        %v675 = vld [vmem:[#allocation10 + $0x24] sm:$0xf]
        %v676 = vld [vmem:[#allocation10 + $0x28] sm:$0xf]
        %v677 = vld [vmem:[#allocation10 + $0x2c] sm:$0xf]
        %v678 = vld [vmem:[#allocation10 + $0x30] sm:$0xf]
        %v679 = vld [vmem:[#allocation10 + $0x34] sm:$0xf]
        %v680 = vld [vmem:[#allocation10 + $0x38] sm:$0xf]
        %v681 = vld [vmem:[#allocation10 + $0x3c] sm:$0xf]
        %v682 = vld [vmem:[%s8] sm:$0x1]
        %v684 = vperm.slane %v682, 0
        %v702 = vunpack.c.l.b16 %v666
        %v703 = vunpack.c.l.b16 %v667
        %v704 = vunpack.c.l.b16 %v668
        %v705 = vunpack.c.l.b16 %v669
        %v706 = vunpack.c.l.b16 %v670
        %v707 = vunpack.c.l.b16 %v671
        %v708 = vunpack.c.l.b16 %v672
        %v709 = vunpack.c.l.b16 %v673
        %v710 = vunpack.c.l.b16 %v674
        %v711 = vunpack.c.l.b16 %v675
        %v712 = vunpack.c.l.b16 %v676
        %v713 = vunpack.c.l.b16 %v677
        %v714 = vunpack.c.l.b16 %v678
        %v715 = vunpack.c.l.b16 %v679
        %v716 = vunpack.c.l.b16 %v680
        %v717 = vunpack.c.l.b16 %v681
        %v718 = vpack.c.b16 %v703, %v702
        %v719 = vpack.c.b16 %v705, %v704
        %v720 = vpack.c.b16 %v707, %v706
        %v721 = vpack.c.b16 %v709, %v708
        %v722 = vpack.c.b16 %v711, %v710
        %v723 = vpack.c.b16 %v713, %v712
        %v724 = vpack.c.b16 %v715, %v714
        %v725 = vpack.c.b16 %v717, %v716
        %734 = vmatpush.bf16.msra.mxu0 %v725
        %735 = vmatpush.bf16.msra.mxu0 %v724
        %736 = vmatpush.bf16.msra.mxu0 %v723
        %737 = vmatpush.bf16.msra.mxu0 %v722
        %738 = vmatpush.bf16.msra.mxu0 %v721
        %739 = vmatpush.bf16.msra.mxu0 %v720
        %740 = vmatpush.bf16.msra.mxu0 %v719
        %741 = vmatpush.bf16.msra.mxu0 %v718
        %742 = vmatmul.bf16.gmra.mxu0 %v665
        %v743 = vpop.f32.mrf.mxu0
        %v744 = vadd.f32 %v684, %v743
        %v745 = vpop.f32.mrf.mxu0
        %746 = vdwg.mxu0
        %747 = vst [vmem:[%s415] sm:$0xff] %v744
        %s748 = sand.u32 %s230, 1
        %s749 = scalar_lea.sflag [#allocation4], %s748
        %s750 = sand.u32 %s230, 1
        %s751 = smul.addr %s750, 8
        %s752 = scalar_lea.vmem [#allocation11], %s751
        // Predicated region
        $region77: #{tpu_custom_call.1} parent=55 // pred_check
          %p753 = pneg %p240
        $region78: #{tpu_custom_call.1} parent=55 // pred_check_branch
          %755 = sbr.rel (%p753) target = $region80
        $region79: #{tpu_custom_call.1} parent=55 // pred_region
          %757 = vsyncadd %s749, 0
          %s758 = smul.addr %s28, 8
          %s759 = scalar_lea.hbm %s9, %s758
          %s761 = sshll.u32 %s752, 4
          %s762 = int_to_ptr.vmem [resolvable:$true] %s761
          %s763 = sshll.u32 %s759, 4
          %s764 = int_to_ptr.hbm [resolvable:$true] %s763
          %766 = dma.vmem_to_hbm [thread:$0]  %s762, 128, %s764, %s749
        $region80: #{tpu_custom_call.1} parent=55 // pred_fallthru
          _
      $region56: #{tpu_custom_call.1} parent=5 // pred_fallthru
        _
      %p767 = scmp.le.s32.totalorder 2, %s23
      // Predicated region
      $region81: #{tpu_custom_call.1} parent=5 // pred_check
        %p768 = pneg %p767
      $region82: #{tpu_custom_call.1} parent=5 // pred_check_branch
        %770 = sbr.rel (%p768) target = $region84
      $region83: #{tpu_custom_call.1} parent=5 // pred_region
        %s771 = ssub.s32 %s23, 2
        // Predicated region
        $region85: #{tpu_custom_call.1} parent=83 // pred_check
          %p772 = pneg %p246
        $region86: #{tpu_custom_call.1} parent=83 // pred_check_branch
          %774 = sbr.rel (%p772) target = $region88
        $region87: #{tpu_custom_call.1} parent=83 // pred_region
          %s775 = sand.u32 %s231, 1
          %s776 = scalar_lea.sflag [#allocation4], %s775
          %s777 = sand.u32 %s231, 1
          %s778 = smul.addr %s777, 8
          %s779 = scalar_lea.vmem [#allocation11], %s778
          %781 = dma.done %s776, 128
        $region88: #{tpu_custom_call.1} parent=83 // pred_fallthru
          _
      $region84: #{tpu_custom_call.1} parent=5 // pred_fallthru
        _
    $region6: #{tpu_custom_call.1} parent=1 // loop_footer
      %s27 = sadd.s32 1, %s23
    $region7: #{tpu_custom_call.1} parent=1 // loop_footer_branch
      %22 = sbr.rel target = $region3
    $region8: #{tpu_custom_call.1} parent=1 // loop_exit
      _
    %782 = vsyncpa [#allocation3], 1
    %s783 = scalar_lea.sflag [#allocation3], 1
    %784 = vsyncpa %s783, 1
    %785 = vsyncpa [#allocation6], 1
    %786 = vsyncpa [#allocation9], 1
    %787 = vsyncpa [#allocation4], 1
    %s788 = scalar_lea.sflag [#allocation4], 1
    %789 = vsyncpa %s788, 1

</llo_original>
